<compile_context>
chip_gen: v7x
topology: tpu7x:2x2x1
jax: 0.10.0
libtpu: 0.0.40
codegen_flags: <defaults>
</compile_context>

<pallas_src>
import functools
import math

import jax
import jax.numpy as jnp
from jax.experimental import pallas as pl
from jax.experimental.pallas import tpu as pltpu

LN_EPS = 1e-5  # XLM-Roberta layer_norm_eps


# ----------------------------- in-kernel math helpers -----------------------------

def _layer_norm(x, g, b):
    mu = jnp.mean(x, axis=-1, keepdims=True)
    var = jnp.mean(jnp.square(x - mu), axis=-1, keepdims=True)
    return (x - mu) * jax.lax.rsqrt(var + LN_EPS) * g + b


def _gelu_tanh(x):
    # tanh-approx GELU: the transcendental goes to the (otherwise idle) EUP slot instead
    # of ~10 VALU multiplies for an erf polynomial.  Diverges from HF's exact erf GELU by
    # ~1e-3 relative on activations.
    c = 0.7978845608028654  # sqrt(2/pi)
    return 0.5 * x * (1.0 + jnp.tanh(c * (x + 0.044715 * x * x * x)))


# ----------------------------------- kernel ---------------------------------------

def encoder_stack_kernel(bias_ref, emb_ref, embg_ref, embb_ref,
                         wqkv_ref, bqkv_ref, wo_ref, bo_ref,
                         ln1g_ref, ln1b_ref, wi_ref, bi_ref,
                         wf_ref, bf_ref, ln2g_ref, ln2b_ref,
                         wt_ref, bt_ref, proj_ref,
                         out_ref, x_scr, *, num_heads):
    l = pl.program_id(1)
    n_layers = pl.num_programs(1)
    bf16 = jnp.bfloat16

    # ---- layer 0: embedding LayerNorm into the resident hidden-state scratch ----
    @pl.when(l == 0)
    def _():
        x_scr[...] = _layer_norm(emb_ref[0], embg_ref[...], embb_ref[...])

    x = x_scr[...]                       # (S, H) f32, carried across the layer axis
    S, H = x.shape
    dh = H // num_heads
    scale = 1.0 / math.sqrt(dh)

    # ---- fused QKV projection: one MXU pass with 3x-wide N ----
    qkv = jnp.dot(x.astype(bf16), wqkv_ref[0],
                  preferred_element_type=jnp.float32) + bqkv_ref[0]   # (S, 3H) f32

    # Stack heads into a leading batch axis (NH, S, dh) so the attention matmuls and
    # the softmax are batched over heads (single dot_general instead of NH tiny dots).
    def head_stack(base):
        return jnp.stack(
            [qkv[:, base + h * dh: base + (h + 1) * dh] for h in range(num_heads)],
            axis=0)

    qh = head_stack(0) * scale           # (NH, S, dh) f32
    kh = head_stack(H)
    vh = head_stack(2 * H)

    s = jax.lax.dot_general(qh.astype(bf16), kh.astype(bf16),
                            (((2,), (2,)), ((0,), (0,))),
                            preferred_element_type=jnp.float32)       # (NH, S, S) f32

    # Additive mask bias, broadcast once over all heads/rows (hoisted, not per-head).
    s = s + bias_ref[0]
    s = s - jnp.max(s, axis=-1, keepdims=True)
    p = jnp.exp(s)
    # Softmax normalization via EUP reciprocal instead of a VALU divide.
    p = p * pl.reciprocal(jnp.sum(p, axis=-1, keepdims=True), approx=True)
    # (Fully padded query rows end up uniform; harmless — only CLS row is consumed.)

    ctx = jax.lax.dot_general(p.astype(bf16), vh.astype(bf16),
                              (((2,), (1,)), ((0,), (0,))),
                              preferred_element_type=jnp.float32)     # (NH, S, dh)
    ctx = jnp.concatenate([ctx[h] for h in range(num_heads)], axis=-1)  # (S, H)

    attn = jnp.dot(ctx.astype(bf16), wo_ref[0],
                   preferred_element_type=jnp.float32) + bo_ref[0]
    y = _layer_norm(x + attn, ln1g_ref[0], ln1b_ref[0])               # f32 stats

    # ---- FFN (bf16 matmuls, f32 accumulate, GELU on EUP) ----
    h1 = _gelu_tanh(jnp.dot(y.astype(bf16), wi_ref[0],
                            preferred_element_type=jnp.float32) + bi_ref[0])
    h2 = jnp.dot(h1.astype(bf16), wf_ref[0],
                 preferred_element_type=jnp.float32) + bf_ref[0]
    xn = _layer_norm(y + h2, ln2g_ref[0], ln2b_ref[0])

    x_scr[...] = xn

    # ---- last layer: fused CLS pooling + transformation + projection ----
    @pl.when(l == n_layers - 1)
    def _():
        cls = xn[0:1, :]                                              # (1, H)
        pooled = jnp.dot(cls.astype(bf16), wt_ref[...],
                         preferred_element_type=jnp.float32) + bt_ref[...]
        out_ref[0] = jnp.dot(pooled.astype(bf16), proj_ref[...],
                             preferred_element_type=jnp.float32)      # (1, O)


# ---------------------------------- wrapper ----------------------------------------

def hf_text_encoder_forward(params, input_ids, *, num_heads, pad_id):
    B, S = input_ids.shape
    H = params["word_emb"].shape[1]
    L = params["wqkv"].shape[0]
    O = params["proj"].shape[1]

    # forward(): attn_mask = (x != pad_token_id).long()
    mask = (input_ids != pad_id).astype(jnp.int32)

    # Roberta position ids: cumsum over non-pad positions, offset by padding_idx.
    pos_ids = jnp.cumsum(mask, axis=1) * mask + pad_id

    # Embedding gathers in plain JAX glue (token_type_ids are all zero).
    emb = (jnp.take(params["word_emb"], input_ids, axis=0)
           + jnp.take(params["pos_emb"], pos_ids, axis=0)
           + params["type_emb"][0][None, None, :]).astype(jnp.float32)

    # Extended attention mask -> additive bias (-1e9 ~ finfo.min used by HF).
    bias = ((1.0 - mask.astype(jnp.float32)) * (-1e9))[:, None, :]    # (B, 1, S)

    def const_spec(arr):
        nd = arr.ndim
        return pl.BlockSpec(arr.shape, lambda b, l: (0,) * nd)

    def layer_spec(arr):
        nd = arr.ndim
        return pl.BlockSpec((1,) + arr.shape[1:], lambda b, l: (l,) + (0,) * (nd - 1))

    layer_names = ["wqkv", "bqkv", "wo", "bo", "ln1g", "ln1b",
                   "wi", "bi", "wf", "bf", "ln2g", "ln2b"]
    args = ([bias, emb, params["emb_ln_g"], params["emb_ln_b"]]
            + [params[n] for n in layer_names]
            + [params["trans_w"], params["trans_b"], params["proj"]])

    in_specs = ([pl.BlockSpec((1, 1, S), lambda b, l: (b, 0, 0)),     # bias (per-batch)
                 pl.BlockSpec((1, S, H), lambda b, l: (b, 0, 0)),     # embeddings
                 const_spec(params["emb_ln_g"]),
                 const_spec(params["emb_ln_b"])]
                + [layer_spec(params[n]) for n in layer_names]
                + [const_spec(params["trans_w"]),
                   const_spec(params["trans_b"]),
                   const_spec(params["proj"])])

    out = pl.pallas_call(
        functools.partial(encoder_stack_kernel, num_heads=num_heads),
        out_shape=jax.ShapeDtypeStruct((B, 1, O), jnp.float32),
        grid=(B, L),
        in_specs=in_specs,
        out_specs=pl.BlockSpec((1, 1, O), lambda b, l: (b, 0, 0)),
        scratch_shapes=[pltpu.VMEM((S, H), jnp.float32)],
        compiler_params=pltpu.CompilerParams(
            dimension_semantics=("parallel", "arbitrary"),
            # Sized generously for the toy shapes; re-derive from the actual weight /
            # activation tile footprint at production sizes (v7x physical VMEM = 64 MiB).
            vmem_limit_bytes=48 * 1024 * 1024),
    )(*args)

    return out[:, 0, :]


# ---------------------------- deterministic param init -----------------------------

def init_params(key, *, vocab, H, I, L, max_pos, P, O, pad_id):
    keys = iter(jax.random.split(key, 64))

    def nrm(shape, dtype=jnp.float32, scale=0.02):
        return (scale * jax.random.normal(next(keys), shape)).astype(dtype)

    bfd = jnp.bfloat16  # matmul weights in bf16 (MXU-native); biases / LN params f32

    params = {}
    params["word_emb"] = nrm((vocab, H)).at[pad_id].set(0.0)   # padding_idx row is zero
    params["pos_emb"] = nrm((max_pos, H)).at[pad_id].set(0.0)
    params["type_emb"] = nrm((1, H))
    params["emb_ln_g"] = jnp.ones((1, H), jnp.float32)
    params["emb_ln_b"] = jnp.zeros((1, H), jnp.float32)

    # Per-layer weights stacked along a leading layer axis; QKV fused along out-features.
    params["wqkv"] = nrm((L, H, 3 * H), bfd)
    params["bqkv"] = nrm((L, 1, 3 * H))
    params["wo"] = nrm((L, H, H), bfd)
    params["bo"] = nrm((L, 1, H))
    params["ln1g"] = jnp.ones((L, 1, H), jnp.float32)
    params["ln1b"] = jnp.zeros((L, 1, H), jnp.float32)
    params["wi"] = nrm((L, H, I), bfd)
    params["bi"] = nrm((L, 1, I))
    params["wf"] = nrm((L, I, H), bfd)
    params["bf"] = nrm((L, 1, H))
    params["ln2g"] = jnp.ones((L, 1, H), jnp.float32)
    params["ln2b"] = jnp.zeros((L, 1, H), jnp.float32)

    params["trans_w"] = nrm((H, P), bfd)   # transformation: Linear(hidden_size, project_dim)
    params["trans_b"] = nrm((1, P))
    params["proj"] = nrm((P, O), bfd)      # self.proj = nn.Parameter(d_model, output_dim)
    return params


# -------------------------------------- main ---------------------------------------

if __name__ == "__main__":
    VOCAB, H, INTER, L, NH = 100, 32, 64, 2, 4
    MAX_POS, PROJECT_DIM, OUTPUT_DIM = 32, 32, 16
    PAD_ID = 1
    B, S = 2, 8

    key = jax.random.PRNGKey(0)
    k_param, k_ids = jax.random.split(key)

    params = init_params(k_param, vocab=VOCAB, H=H, I=INTER, L=L,
                         max_pos=MAX_POS, P=PROJECT_DIM, O=OUTPUT_DIM, pad_id=PAD_ID)

    ids = jax.random.randint(k_ids, (B, S), 2, VOCAB, dtype=jnp.int32)
    ids = ids.at[0, 0].set(0).at[1, 0].set(0)   # BOS/CLS token
    ids = ids.at[1, 5:].set(PAD_ID)             # padding on second sequence

    out = hf_text_encoder_forward(params, ids, num_heads=NH, pad_id=PAD_ID)
    out = jax.block_until_ready(out)
    assert out.shape == (B, OUTPUT_DIM) and out.dtype == jnp.float32
    print("KERNEL_OK")
</pallas_src>

<mosaic_0001>
module attributes {stable_mosaic.version = 11 : i64} {
  func.func @encoder_stack_kernel(%arg0: i32, %arg1: i32, %arg2: memref<1x1x8xf32, #tpu.memory_space<vmem>>, %arg3: memref<1x8x32xf32, #tpu.memory_space<vmem>>, %arg4: memref<1x32xf32, #tpu.memory_space<vmem>>, %arg5: memref<1x32xf32, #tpu.memory_space<vmem>>, %arg6: memref<1x32x96xbf16, #tpu.memory_space<vmem>>, %arg7: memref<1x1x96xf32, #tpu.memory_space<vmem>>, %arg8: memref<1x32x32xbf16, #tpu.memory_space<vmem>>, %arg9: memref<1x1x32xf32, #tpu.memory_space<vmem>>, %arg10: memref<1x1x32xf32, #tpu.memory_space<vmem>>, %arg11: memref<1x1x32xf32, #tpu.memory_space<vmem>>, %arg12: memref<1x32x64xbf16, #tpu.memory_space<vmem>>, %arg13: memref<1x1x64xf32, #tpu.memory_space<vmem>>, %arg14: memref<1x64x32xbf16, #tpu.memory_space<vmem>>, %arg15: memref<1x1x32xf32, #tpu.memory_space<vmem>>, %arg16: memref<1x1x32xf32, #tpu.memory_space<vmem>>, %arg17: memref<1x1x32xf32, #tpu.memory_space<vmem>>, %arg18: memref<32x32xbf16, #tpu.memory_space<vmem>>, %arg19: memref<1x32xf32, #tpu.memory_space<vmem>>, %arg20: memref<32x16xbf16, #tpu.memory_space<vmem>>, %arg21: memref<1x1x16xf32, #tpu.memory_space<vmem>>, %arg22: memref<8x32xf32, #tpu.memory_space<vmem>>) attributes {dimension_semantics = [#tpu.dimension_semantics<parallel>, #tpu.dimension_semantics<arbitrary>], iteration_bounds = array<i64: 2, 2>, scalar_prefetch = 0 : i64, scratch_operands = 1 : i64, tpu.core_type = #tpu.core_type<tc>, window_params = [{transform_indices = @transform_0, window_bounds = array<i64: 1, 1, 8>}, {transform_indices = @transform_1, window_bounds = array<i64: 1, 8, 32>}, {pipeline_mode = #tpu.pipeline_mode<synchronous>, transform_indices = @transform_2, window_bounds = array<i64: 1, 32>}, {pipeline_mode = #tpu.pipeline_mode<synchronous>, transform_indices = @transform_3, window_bounds = array<i64: 1, 32>}, {transform_indices = @transform_4, window_bounds = array<i64: 1, 32, 96>}, {transform_indices = @transform_5, window_bounds = array<i64: 1, 1, 96>}, {transform_indices = @transform_6, window_bounds = array<i64: 1, 32, 32>}, {transform_indices = @transform_7, window_bounds = array<i64: 1, 1, 32>}, {transform_indices = @transform_8, window_bounds = array<i64: 1, 1, 32>}, {transform_indices = @transform_9, window_bounds = array<i64: 1, 1, 32>}, {transform_indices = @transform_10, window_bounds = array<i64: 1, 32, 64>}, {transform_indices = @transform_11, window_bounds = array<i64: 1, 1, 64>}, {transform_indices = @transform_12, window_bounds = array<i64: 1, 64, 32>}, {transform_indices = @transform_13, window_bounds = array<i64: 1, 1, 32>}, {transform_indices = @transform_14, window_bounds = array<i64: 1, 1, 32>}, {transform_indices = @transform_15, window_bounds = array<i64: 1, 1, 32>}, {pipeline_mode = #tpu.pipeline_mode<synchronous>, transform_indices = @transform_16, window_bounds = array<i64: 32, 32>}, {pipeline_mode = #tpu.pipeline_mode<synchronous>, transform_indices = @transform_17, window_bounds = array<i64: 1, 32>}, {pipeline_mode = #tpu.pipeline_mode<synchronous>, transform_indices = @transform_18, window_bounds = array<i64: 32, 16>}, {transform_indices = @transform_19, window_bounds = array<i64: 1, 1, 16>}]} {
    %c0_i32 = arith.constant 0 : i32
    %0 = arith.cmpi eq, %arg1, %c0_i32 : i32
    %1 = arith.extui %0 : i1 to i32
    %c0_i32_0 = arith.constant 0 : i32
    %2 = arith.cmpi ne, %1, %c0_i32_0 : i32
    scf.if %2 {
      %c0_66 = arith.constant 0 : index
      %c0_67 = arith.constant 0 : index
      %c0_68 = arith.constant 0 : index
      %166 = vector.load %arg3[%c0_66, %c0_67, %c0_68] : memref<1x8x32xf32, #tpu.memory_space<vmem>>, vector<1x8x32xf32>
      %167 = vector.shape_cast %166 : vector<1x8x32xf32> to vector<8x32xf32>
      %c0_69 = arith.constant 0 : index
      %c0_70 = arith.constant 0 : index
      %168 = vector.load %arg4[%c0_69, %c0_70] : memref<1x32xf32, #tpu.memory_space<vmem>>, vector<1x32xf32>
      %c0_71 = arith.constant 0 : index
      %c0_72 = arith.constant 0 : index
      %169 = vector.load %arg5[%c0_71, %c0_72] : memref<1x32xf32, #tpu.memory_space<vmem>>, vector<1x32xf32>
      %cst_73 = arith.constant dense<0.000000e+00> : vector<8xf32>
      %170 = vector.multi_reduction <add>, %167, %cst_73 [1] : vector<8x32xf32> to vector<8xf32>
      %171 = vector.shape_cast %170 : vector<8xf32> to vector<8x1xf32>
      %cst_74 = arith.constant 3.200000e+01 : f32
      %172 = vector.broadcast %cst_74 : f32 to vector<8x1xf32>
      %173 = arith.divf %171, %172 : vector<8x1xf32>
      %174 = vector.broadcast %173 : vector<8x1xf32> to vector<8x32xf32>
      %175 = arith.subf %167, %174 : vector<8x32xf32>
      %176 = arith.mulf %175, %175 : vector<8x32xf32>
      %cst_75 = arith.constant dense<0.000000e+00> : vector<8xf32>
      %177 = vector.multi_reduction <add>, %176, %cst_75 [1] : vector<8x32xf32> to vector<8xf32>
      %178 = vector.shape_cast %177 : vector<8xf32> to vector<8x1xf32>
      %cst_76 = arith.constant 3.200000e+01 : f32
      %179 = vector.broadcast %cst_76 : f32 to vector<8x1xf32>
      %180 = arith.divf %178, %179 : vector<8x1xf32>
      %181 = vector.broadcast %173 : vector<8x1xf32> to vector<8x32xf32>
      %182 = arith.subf %167, %181 : vector<8x32xf32>
      %cst_77 = arith.constant 9.99999974E-6 : f32
      %183 = vector.broadcast %cst_77 : f32 to vector<8x1xf32>
      %184 = arith.addf %180, %183 : vector<8x1xf32>
      %185 = math.rsqrt %184 : vector<8x1xf32>
      %186 = vector.broadcast %185 : vector<8x1xf32> to vector<8x32xf32>
      %187 = arith.mulf %182, %186 : vector<8x32xf32>
      %188 = vector.broadcast %168 : vector<1x32xf32> to vector<8x32xf32>
      %189 = arith.mulf %187, %188 : vector<8x32xf32>
      %190 = vector.broadcast %169 : vector<1x32xf32> to vector<8x32xf32>
      %191 = arith.addf %189, %190 : vector<8x32xf32>
      %c0_78 = arith.constant 0 : index
      %c0_79 = arith.constant 0 : index
      %192 = vector.load %arg22[%c0_78, %c0_79] : memref<8x32xf32, #tpu.memory_space<vmem>>, vector<8x32xf32>
      tpu.vector_store %arg22[%c0_78, %c0_79], %191 {strides = array<i32>} : memref<8x32xf32, #tpu.memory_space<vmem>>, vector<8x32xf32>,
    } else {
    }
    %c0 = arith.constant 0 : index
    %c0_1 = arith.constant 0 : index
    %3 = vector.load %arg22[%c0, %c0_1] : memref<8x32xf32, #tpu.memory_space<vmem>>, vector<8x32xf32>
    %4 = arith.truncf %3 : vector<8x32xf32> to vector<8x32xbf16>
    %c0_2 = arith.constant 0 : index
    %c0_3 = arith.constant 0 : index
    %c0_4 = arith.constant 0 : index
    %5 = vector.load %arg6[%c0_2, %c0_3, %c0_4] : memref<1x32x96xbf16, #tpu.memory_space<vmem>>, vector<1x32x96xbf16>
    %6 = vector.shape_cast %5 : vector<1x32x96xbf16> to vector<32x96xbf16>
    %cst = arith.constant dense<0.000000e+00> : vector<8x96xf32>
    %7 = tpu.matmul %4, %6, %cst {dimension_numbers = #tpu.dot_dimension_numbers<[1], [0], [0], [1], [0, 0, 1, 1], [], []>} : vector<8x32xbf16>, vector<32x96xbf16>, vector<8x96xf32> -> vector<8x96xf32>
    %c0_5 = arith.constant 0 : index
    %c0_6 = arith.constant 0 : index
    %c0_7 = arith.constant 0 : index
    %8 = vector.load %arg7[%c0_5, %c0_6, %c0_7] : memref<1x1x96xf32, #tpu.memory_space<vmem>>, vector<1x1x96xf32>
    %9 = vector.shape_cast %8 : vector<1x1x96xf32> to vector<1x96xf32>
    %10 = vector.broadcast %9 : vector<1x96xf32> to vector<8x96xf32>
    %11 = arith.addf %7, %10 : vector<8x96xf32>
    %12 = vector.extract_strided_slice %11 {offsets = [0, 0], sizes = [8, 8], strides = [1, 1]} : vector<8x96xf32> to vector<8x8xf32>
    %13 = vector.extract_strided_slice %11 {offsets = [0, 8], sizes = [8, 8], strides = [1, 1]} : vector<8x96xf32> to vector<8x8xf32>
    %14 = vector.extract_strided_slice %11 {offsets = [0, 16], sizes = [8, 8], strides = [1, 1]} : vector<8x96xf32> to vector<8x8xf32>
    %15 = vector.extract_strided_slice %11 {offsets = [0, 24], sizes = [8, 8], strides = [1, 1]} : vector<8x96xf32> to vector<8x8xf32>
    %16 = vector.shape_cast %12 : vector<8x8xf32> to vector<1x8x8xf32>
    %17 = vector.shape_cast %13 : vector<8x8xf32> to vector<1x8x8xf32>
    %18 = vector.shape_cast %14 : vector<8x8xf32> to vector<1x8x8xf32>
    %19 = vector.shape_cast %15 : vector<8x8xf32> to vector<1x8x8xf32>
    %20 = tpu.concatenate %16, %17, %18, %19 in 0 : vector<1x8x8xf32>, vector<1x8x8xf32>, vector<1x8x8xf32>, vector<1x8x8xf32> -> vector<4x8x8xf32>
    %cst_8 = arith.constant 0.353553385 : f32
    %21 = vector.broadcast %cst_8 : f32 to vector<4x8x8xf32>
    %22 = arith.mulf %20, %21 : vector<4x8x8xf32>
    %23 = vector.extract_strided_slice %11 {offsets = [0, 32], sizes = [8, 8], strides = [1, 1]} : vector<8x96xf32> to vector<8x8xf32>
    %24 = vector.extract_strided_slice %11 {offsets = [0, 40], sizes = [8, 8], strides = [1, 1]} : vector<8x96xf32> to vector<8x8xf32>
    %25 = vector.extract_strided_slice %11 {offsets = [0, 48], sizes = [8, 8], strides = [1, 1]} : vector<8x96xf32> to vector<8x8xf32>
    %26 = vector.extract_strided_slice %11 {offsets = [0, 56], sizes = [8, 8], strides = [1, 1]} : vector<8x96xf32> to vector<8x8xf32>
    %27 = vector.shape_cast %23 : vector<8x8xf32> to vector<1x8x8xf32>
    %28 = vector.shape_cast %24 : vector<8x8xf32> to vector<1x8x8xf32>
    %29 = vector.shape_cast %25 : vector<8x8xf32> to vector<1x8x8xf32>
    %30 = vector.shape_cast %26 : vector<8x8xf32> to vector<1x8x8xf32>
    %31 = tpu.concatenate %27, %28, %29, %30 in 0 : vector<1x8x8xf32>, vector<1x8x8xf32>, vector<1x8x8xf32>, vector<1x8x8xf32> -> vector<4x8x8xf32>
    %32 = vector.extract_strided_slice %11 {offsets = [0, 64], sizes = [8, 8], strides = [1, 1]} : vector<8x96xf32> to vector<8x8xf32>
    %33 = vector.extract_strided_slice %11 {offsets = [0, 72], sizes = [8, 8], strides = [1, 1]} : vector<8x96xf32> to vector<8x8xf32>
    %34 = vector.extract_strided_slice %11 {offsets = [0, 80], sizes = [8, 8], strides = [1, 1]} : vector<8x96xf32> to vector<8x8xf32>
    %35 = vector.extract_strided_slice %11 {offsets = [0, 88], sizes = [8, 8], strides = [1, 1]} : vector<8x96xf32> to vector<8x8xf32>
    %36 = vector.shape_cast %32 : vector<8x8xf32> to vector<1x8x8xf32>
    %37 = vector.shape_cast %33 : vector<8x8xf32> to vector<1x8x8xf32>
    %38 = vector.shape_cast %34 : vector<8x8xf32> to vector<1x8x8xf32>
    %39 = vector.shape_cast %35 : vector<8x8xf32> to vector<1x8x8xf32>
    %40 = tpu.concatenate %36, %37, %38, %39 in 0 : vector<1x8x8xf32>, vector<1x8x8xf32>, vector<1x8x8xf32>, vector<1x8x8xf32> -> vector<4x8x8xf32>
    %41 = arith.truncf %22 : vector<4x8x8xf32> to vector<4x8x8xbf16>
    %42 = arith.truncf %31 : vector<4x8x8xf32> to vector<4x8x8xbf16>
    %cst_9 = arith.constant dense<0.000000e+00> : vector<4x8x8xf32>
    %43 = tpu.matmul %41, %42, %cst_9 {dimension_numbers = #tpu.dot_dimension_numbers<[2], [2], [1], [1], [0, 0, 0, 1, 1, 1], [0], [0]>} : vector<4x8x8xbf16>, vector<4x8x8xbf16>, vector<4x8x8xf32> -> vector<4x8x8xf32>
    %c0_10 = arith.constant 0 : index
    %c0_11 = arith.constant 0 : index
    %c0_12 = arith.constant 0 : index
    %44 = vector.load %arg2[%c0_10, %c0_11, %c0_12] : memref<1x1x8xf32, #tpu.memory_space<vmem>>, vector<1x1x8xf32>
    %45 = vector.shape_cast %44 : vector<1x1x8xf32> to vector<1x8xf32>
    %46 = vector.shape_cast %45 : vector<1x8xf32> to vector<1x1x8xf32>
    %47 = vector.broadcast %46 : vector<1x1x8xf32> to vector<4x8x8xf32>
    %48 = arith.addf %43, %47 : vector<4x8x8xf32>
    %cst_13 = arith.constant dense<0xFF800000> : vector<4x8xf32>
    %49 = vector.multi_reduction <maximumf>, %48, %cst_13 [2] : vector<4x8x8xf32> to vector<4x8xf32>
    %50 = vector.shape_cast %49 : vector<4x8xf32> to vector<4x8x1xf32>
    %51 = vector.broadcast %50 : vector<4x8x1xf32> to vector<4x8x8xf32>
    %52 = arith.subf %48, %51 : vector<4x8x8xf32>
    %53 = math.exp %52 : vector<4x8x8xf32>
    %cst_14 = arith.constant dense<0.000000e+00> : vector<4x8xf32>
    %54 = vector.multi_reduction <add>, %53, %cst_14 [2] : vector<4x8x8xf32> to vector<4x8xf32>
    %55 = vector.shape_cast %54 : vector<4x8xf32> to vector<4x8x1xf32>
    %56 = tpu.reciprocal %55 {approx = true} : vector<4x8x1xf32> -> vector<4x8x1xf32>
    %57 = vector.broadcast %56 : vector<4x8x1xf32> to vector<4x8x8xf32>
    %58 = arith.mulf %53, %57 : vector<4x8x8xf32>
    %59 = arith.truncf %58 : vector<4x8x8xf32> to vector<4x8x8xbf16>
    %60 = arith.truncf %40 : vector<4x8x8xf32> to vector<4x8x8xbf16>
    %cst_15 = arith.constant dense<0.000000e+00> : vector<4x8x8xf32>
    %61 = tpu.matmul %59, %60, %cst_15 {dimension_numbers = #tpu.dot_dimension_numbers<[2], [1], [1], [2], [0, 0, 0, 1, 1, 2], [0], [0]>} : vector<4x8x8xbf16>, vector<4x8x8xbf16>, vector<4x8x8xf32> -> vector<4x8x8xf32>
    %62 = vector.extract_strided_slice %61 {offsets = [0, 0, 0], sizes = [1, 8, 8], strides = [1, 1, 1]} : vector<4x8x8xf32> to vector<1x8x8xf32>
    %63 = vector.shape_cast %62 : vector<1x8x8xf32> to vector<8x8xf32>
    %64 = vector.extract_strided_slice %61 {offsets = [1, 0, 0], sizes = [1, 8, 8], strides = [1, 1, 1]} : vector<4x8x8xf32> to vector<1x8x8xf32>
    %65 = vector.shape_cast %64 : vector<1x8x8xf32> to vector<8x8xf32>
    %66 = vector.extract_strided_slice %61 {offsets = [2, 0, 0], sizes = [1, 8, 8], strides = [1, 1, 1]} : vector<4x8x8xf32> to vector<1x8x8xf32>
    %67 = vector.shape_cast %66 : vector<1x8x8xf32> to vector<8x8xf32>
    %68 = vector.extract_strided_slice %61 {offsets = [3, 0, 0], sizes = [1, 8, 8], strides = [1, 1, 1]} : vector<4x8x8xf32> to vector<1x8x8xf32>
    %69 = vector.shape_cast %68 : vector<1x8x8xf32> to vector<8x8xf32>
    %70 = tpu.concatenate %63, %65, %67, %69 in 1 : vector<8x8xf32>, vector<8x8xf32>, vector<8x8xf32>, vector<8x8xf32> -> vector<8x32xf32>
    %71 = arith.truncf %70 : vector<8x32xf32> to vector<8x32xbf16>
    %c0_16 = arith.constant 0 : index
    %c0_17 = arith.constant 0 : index
    %c0_18 = arith.constant 0 : index
    %72 = vector.load %arg8[%c0_16, %c0_17, %c0_18] : memref<1x32x32xbf16, #tpu.memory_space<vmem>>, vector<1x32x32xbf16>
    %73 = vector.shape_cast %72 : vector<1x32x32xbf16> to vector<32x32xbf16>
    %cst_19 = arith.constant dense<0.000000e+00> : vector<8x32xf32>
    %74 = tpu.matmul %71, %73, %cst_19 {dimension_numbers = #tpu.dot_dimension_numbers<[1], [0], [0], [1], [0, 0, 1, 1], [], []>} : vector<8x32xbf16>, vector<32x32xbf16>, vector<8x32xf32> -> vector<8x32xf32>
    %c0_20 = arith.constant 0 : index
    %c0_21 = arith.constant 0 : index
    %c0_22 = arith.constant 0 : index
    %75 = vector.load %arg9[%c0_20, %c0_21, %c0_22] : memref<1x1x32xf32, #tpu.memory_space<vmem>>, vector<1x1x32xf32>
    %76 = vector.shape_cast %75 : vector<1x1x32xf32> to vector<1x32xf32>
    %77 = vector.broadcast %76 : vector<1x32xf32> to vector<8x32xf32>
    %78 = arith.addf %74, %77 : vector<8x32xf32>
    %79 = arith.addf %3, %78 : vector<8x32xf32>
    %c0_23 = arith.constant 0 : index
    %c0_24 = arith.constant 0 : index
    %c0_25 = arith.constant 0 : index
    %80 = vector.load %arg10[%c0_23, %c0_24, %c0_25] : memref<1x1x32xf32, #tpu.memory_space<vmem>>, vector<1x1x32xf32>
    %81 = vector.shape_cast %80 : vector<1x1x32xf32> to vector<1x32xf32>
    %c0_26 = arith.constant 0 : index
    %c0_27 = arith.constant 0 : index
    %c0_28 = arith.constant 0 : index
    %82 = vector.load %arg11[%c0_26, %c0_27, %c0_28] : memref<1x1x32xf32, #tpu.memory_space<vmem>>, vector<1x1x32xf32>
    %83 = vector.shape_cast %82 : vector<1x1x32xf32> to vector<1x32xf32>
    %cst_29 = arith.constant dense<0.000000e+00> : vector<8xf32>
    %84 = vector.multi_reduction <add>, %79, %cst_29 [1] : vector<8x32xf32> to vector<8xf32>
    %85 = vector.shape_cast %84 : vector<8xf32> to vector<8x1xf32>
    %cst_30 = arith.constant 3.200000e+01 : f32
    %86 = vector.broadcast %cst_30 : f32 to vector<8x1xf32>
    %87 = arith.divf %85, %86 : vector<8x1xf32>
    %88 = vector.broadcast %87 : vector<8x1xf32> to vector<8x32xf32>
    %89 = arith.subf %79, %88 : vector<8x32xf32>
    %90 = arith.mulf %89, %89 : vector<8x32xf32>
    %cst_31 = arith.constant dense<0.000000e+00> : vector<8xf32>
    %91 = vector.multi_reduction <add>, %90, %cst_31 [1] : vector<8x32xf32> to vector<8xf32>
    %92 = vector.shape_cast %91 : vector<8xf32> to vector<8x1xf32>
    %cst_32 = arith.constant 3.200000e+01 : f32
    %93 = vector.broadcast %cst_32 : f32 to vector<8x1xf32>
    %94 = arith.divf %92, %93 : vector<8x1xf32>
    %95 = vector.broadcast %87 : vector<8x1xf32> to vector<8x32xf32>
    %96 = arith.subf %79, %95 : vector<8x32xf32>
    %cst_33 = arith.constant 9.99999974E-6 : f32
    %97 = vector.broadcast %cst_33 : f32 to vector<8x1xf32>
    %98 = arith.addf %94, %97 : vector<8x1xf32>
    %99 = math.rsqrt %98 : vector<8x1xf32>
    %100 = vector.broadcast %99 : vector<8x1xf32> to vector<8x32xf32>
    %101 = arith.mulf %96, %100 : vector<8x32xf32>
    %102 = vector.broadcast %81 : vector<1x32xf32> to vector<8x32xf32>
    %103 = arith.mulf %101, %102 : vector<8x32xf32>
    %104 = vector.broadcast %83 : vector<1x32xf32> to vector<8x32xf32>
    %105 = arith.addf %103, %104 : vector<8x32xf32>
    %106 = arith.truncf %105 : vector<8x32xf32> to vector<8x32xbf16>
    %c0_34 = arith.constant 0 : index
    %c0_35 = arith.constant 0 : index
    %c0_36 = arith.constant 0 : index
    %107 = vector.load %arg12[%c0_34, %c0_35, %c0_36] : memref<1x32x64xbf16, #tpu.memory_space<vmem>>, vector<1x32x64xbf16>
    %108 = vector.shape_cast %107 : vector<1x32x64xbf16> to vector<32x64xbf16>
    %cst_37 = arith.constant dense<0.000000e+00> : vector<8x64xf32>
    %109 = tpu.matmul %106, %108, %cst_37 {dimension_numbers = #tpu.dot_dimension_numbers<[1], [0], [0], [1], [0, 0, 1, 1], [], []>} : vector<8x32xbf16>, vector<32x64xbf16>, vector<8x64xf32> -> vector<8x64xf32>
    %c0_38 = arith.constant 0 : index
    %c0_39 = arith.constant 0 : index
    %c0_40 = arith.constant 0 : index
    %110 = vector.load %arg13[%c0_38, %c0_39, %c0_40] : memref<1x1x64xf32, #tpu.memory_space<vmem>>, vector<1x1x64xf32>
    %111 = vector.shape_cast %110 : vector<1x1x64xf32> to vector<1x64xf32>
    %112 = vector.broadcast %111 : vector<1x64xf32> to vector<8x64xf32>
    %113 = arith.addf %109, %112 : vector<8x64xf32>
    %cst_41 = arith.constant 5.000000e-01 : f32
    %114 = vector.broadcast %cst_41 : f32 to vector<8x64xf32>
    %115 = arith.mulf %114, %113 : vector<8x64xf32>
    %cst_42 = arith.constant 4.471500e-02 : f32
    %116 = vector.broadcast %cst_42 : f32 to vector<8x64xf32>
    %117 = arith.mulf %116, %113 : vector<8x64xf32>
    %118 = arith.mulf %117, %113 : vector<8x64xf32>
    %119 = arith.mulf %118, %113 : vector<8x64xf32>
    %120 = arith.addf %113, %119 : vector<8x64xf32>
    %cst_43 = arith.constant 0.797884583 : f32
    %121 = vector.broadcast %cst_43 : f32 to vector<8x64xf32>
    %122 = arith.mulf %121, %120 : vector<8x64xf32>
    %123 = math.tanh %122 : vector<8x64xf32>
    %cst_44 = arith.constant 1.000000e+00 : f32
    %124 = vector.broadcast %cst_44 : f32 to vector<8x64xf32>
    %125 = arith.addf %124, %123 : vector<8x64xf32>
    %126 = arith.mulf %115, %125 : vector<8x64xf32>
    %127 = arith.truncf %126 : vector<8x64xf32> to vector<8x64xbf16>
    %c0_45 = arith.constant 0 : index
    %c0_46 = arith.constant 0 : index
    %c0_47 = arith.constant 0 : index
    %128 = vector.load %arg14[%c0_45, %c0_46, %c0_47] : memref<1x64x32xbf16, #tpu.memory_space<vmem>>, vector<1x64x32xbf16>
    %129 = vector.shape_cast %128 : vector<1x64x32xbf16> to vector<64x32xbf16>
    %cst_48 = arith.constant dense<0.000000e+00> : vector<8x32xf32>
    %130 = tpu.matmul %127, %129, %cst_48 {dimension_numbers = #tpu.dot_dimension_numbers<[1], [0], [0], [1], [0, 0, 1, 1], [], []>} : vector<8x64xbf16>, vector<64x32xbf16>, vector<8x32xf32> -> vector<8x32xf32>
    %c0_49 = arith.constant 0 : index
    %c0_50 = arith.constant 0 : index
    %c0_51 = arith.constant 0 : index
    %131 = vector.load %arg15[%c0_49, %c0_50, %c0_51] : memref<1x1x32xf32, #tpu.memory_space<vmem>>, vector<1x1x32xf32>
    %132 = vector.shape_cast %131 : vector<1x1x32xf32> to vector<1x32xf32>
    %133 = vector.broadcast %132 : vector<1x32xf32> to vector<8x32xf32>
    %134 = arith.addf %130, %133 : vector<8x32xf32>
    %135 = arith.addf %105, %134 : vector<8x32xf32>
    %c0_52 = arith.constant 0 : index
    %c0_53 = arith.constant 0 : index
    %c0_54 = arith.constant 0 : index
    %136 = vector.load %arg16[%c0_52, %c0_53, %c0_54] : memref<1x1x32xf32, #tpu.memory_space<vmem>>, vector<1x1x32xf32>
    %137 = vector.shape_cast %136 : vector<1x1x32xf32> to vector<1x32xf32>
    %c0_55 = arith.constant 0 : index
    %c0_56 = arith.constant 0 : index
    %c0_57 = arith.constant 0 : index
    %138 = vector.load %arg17[%c0_55, %c0_56, %c0_57] : memref<1x1x32xf32, #tpu.memory_space<vmem>>, vector<1x1x32xf32>
    %139 = vector.shape_cast %138 : vector<1x1x32xf32> to vector<1x32xf32>
    %cst_58 = arith.constant dense<0.000000e+00> : vector<8xf32>
    %140 = vector.multi_reduction <add>, %135, %cst_58 [1] : vector<8x32xf32> to vector<8xf32>
    %141 = vector.shape_cast %140 : vector<8xf32> to vector<8x1xf32>
    %cst_59 = arith.constant 3.200000e+01 : f32
    %142 = vector.broadcast %cst_59 : f32 to vector<8x1xf32>
    %143 = arith.divf %141, %142 : vector<8x1xf32>
    %144 = vector.broadcast %143 : vector<8x1xf32> to vector<8x32xf32>
    %145 = arith.subf %135, %144 : vector<8x32xf32>
    %146 = arith.mulf %145, %145 : vector<8x32xf32>
    %cst_60 = arith.constant dense<0.000000e+00> : vector<8xf32>
    %147 = vector.multi_reduction <add>, %146, %cst_60 [1] : vector<8x32xf32> to vector<8xf32>
    %148 = vector.shape_cast %147 : vector<8xf32> to vector<8x1xf32>
    %cst_61 = arith.constant 3.200000e+01 : f32
    %149 = vector.broadcast %cst_61 : f32 to vector<8x1xf32>
    %150 = arith.divf %148, %149 : vector<8x1xf32>
    %151 = vector.broadcast %143 : vector<8x1xf32> to vector<8x32xf32>
    %152 = arith.subf %135, %151 : vector<8x32xf32>
    %cst_62 = arith.constant 9.99999974E-6 : f32
    %153 = vector.broadcast %cst_62 : f32 to vector<8x1xf32>
    %154 = arith.addf %150, %153 : vector<8x1xf32>
    %155 = math.rsqrt %154 : vector<8x1xf32>
    %156 = vector.broadcast %155 : vector<8x1xf32> to vector<8x32xf32>
    %157 = arith.mulf %152, %156 : vector<8x32xf32>
    %158 = vector.broadcast %137 : vector<1x32xf32> to vector<8x32xf32>
    %159 = arith.mulf %157, %158 : vector<8x32xf32>
    %160 = vector.broadcast %139 : vector<1x32xf32> to vector<8x32xf32>
    %161 = arith.addf %159, %160 : vector<8x32xf32>
    %c0_63 = arith.constant 0 : index
    %c0_64 = arith.constant 0 : index
    %162 = vector.load %arg22[%c0_63, %c0_64] : memref<8x32xf32, #tpu.memory_space<vmem>>, vector<8x32xf32>
    tpu.vector_store %arg22[%c0_63, %c0_64], %161 {strides = array<i32>} : memref<8x32xf32, #tpu.memory_space<vmem>>, vector<8x32xf32>,
    %c1_i32 = arith.constant 1 : i32
    %163 = arith.cmpi eq, %arg1, %c1_i32 : i32
    %164 = arith.extui %163 : i1 to i32
    %c0_i32_65 = arith.constant 0 : i32
    %165 = arith.cmpi ne, %164, %c0_i32_65 : i32
    scf.if %165 {
      %166 = vector.extract_strided_slice %161 {offsets = [0, 0], sizes = [1, 32], strides = [1, 1]} : vector<8x32xf32> to vector<1x32xf32>
      %167 = arith.truncf %166 : vector<1x32xf32> to vector<1x32xbf16>
      %c0_66 = arith.constant 0 : index
      %c0_67 = arith.constant 0 : index
      %168 = vector.load %arg18[%c0_66, %c0_67] : memref<32x32xbf16, #tpu.memory_space<vmem>>, vector<32x32xbf16>
      %cst_68 = arith.constant dense<0.000000e+00> : vector<1x32xf32>
      %169 = tpu.matmul %167, %168, %cst_68 {dimension_numbers = #tpu.dot_dimension_numbers<[1], [0], [0], [1], [0, 0, 1, 1], [], []>} : vector<1x32xbf16>, vector<32x32xbf16>, vector<1x32xf32> -> vector<1x32xf32>
      %c0_69 = arith.constant 0 : index
      %c0_70 = arith.constant 0 : index
      %170 = vector.load %arg19[%c0_69, %c0_70] : memref<1x32xf32, #tpu.memory_space<vmem>>, vector<1x32xf32>
      %171 = arith.addf %169, %170 : vector<1x32xf32>
      %172 = arith.truncf %171 : vector<1x32xf32> to vector<1x32xbf16>
      %c0_71 = arith.constant 0 : index
      %c0_72 = arith.constant 0 : index
      %173 = vector.load %arg20[%c0_71, %c0_72] : memref<32x16xbf16, #tpu.memory_space<vmem>>, vector<32x16xbf16>
      %cst_73 = arith.constant dense<0.000000e+00> : vector<1x16xf32>
      %174 = tpu.matmul %172, %173, %cst_73 {dimension_numbers = #tpu.dot_dimension_numbers<[1], [0], [0], [1], [0, 0, 1, 1], [], []>} : vector<1x32xbf16>, vector<32x16xbf16>, vector<1x16xf32> -> vector<1x16xf32>
      %c0_74 = arith.constant 0 : index
      %c0_75 = arith.constant 0 : index
      %c0_76 = arith.constant 0 : index
      %175 = vector.load %arg21[%c0_74, %c0_75, %c0_76] : memref<1x1x16xf32, #tpu.memory_space<vmem>>, vector<1x1x16xf32>
      %176 = vector.shape_cast %175 : vector<1x1x16xf32> to vector<1x16xf32>
      %177 = vector.shape_cast %174 : vector<1x16xf32> to vector<1x1x16xf32>
      tpu.vector_store %arg21[%c0_74, %c0_75, %c0_76], %177 {strides = array<i32>} : memref<1x1x16xf32, #tpu.memory_space<vmem>>, vector<1x1x16xf32>,
    } else {
    }
    return
  }
  func.func @transform_0(%arg0: i32, %arg1: i32) -> (i32, i32, i32) {
    %c0_i32 = arith.constant 0 : i32
    %c0_i32_0 = arith.constant 0 : i32
    %c0_i32_1 = arith.constant 0 : i32
    return %arg0, %c0_i32, %c0_i32_0 : i32, i32, i32
  }
  func.func @transform_1(%arg0: i32, %arg1: i32) -> (i32, i32, i32) {
    %c0_i32 = arith.constant 0 : i32
    %c0_i32_0 = arith.constant 0 : i32
    %c0_i32_1 = arith.constant 0 : i32
    return %arg0, %c0_i32, %c0_i32_0 : i32, i32, i32
  }
  func.func @transform_2(%arg0: i32, %arg1: i32) -> (i32, i32) {
    %c0_i32 = arith.constant 0 : i32
    %c0_i32_0 = arith.constant 0 : i32
    %c0_i32_1 = arith.constant 0 : i32
    return %c0_i32, %c0_i32_0 : i32, i32
  }
  func.func @transform_3(%arg0: i32, %arg1: i32) -> (i32, i32) {
    %c0_i32 = arith.constant 0 : i32
    %c0_i32_0 = arith.constant 0 : i32
    %c0_i32_1 = arith.constant 0 : i32
    return %c0_i32, %c0_i32_0 : i32, i32
  }
  func.func @transform_4(%arg0: i32, %arg1: i32) -> (i32, i32, i32) {
    %c0_i32 = arith.constant 0 : i32
    %c0_i32_0 = arith.constant 0 : i32
    %c0_i32_1 = arith.constant 0 : i32
    return %arg1, %c0_i32, %c0_i32_0 : i32, i32, i32
  }
  func.func @transform_5(%arg0: i32, %arg1: i32) -> (i32, i32, i32) {
    %c0_i32 = arith.constant 0 : i32
    %c0_i32_0 = arith.constant 0 : i32
    %c0_i32_1 = arith.constant 0 : i32
    return %arg1, %c0_i32, %c0_i32_0 : i32, i32, i32
  }
  func.func @transform_6(%arg0: i32, %arg1: i32) -> (i32, i32, i32) {
    %c0_i32 = arith.constant 0 : i32
    %c0_i32_0 = arith.constant 0 : i32
    %c0_i32_1 = arith.constant 0 : i32
    return %arg1, %c0_i32, %c0_i32_0 : i32, i32, i32
  }
  func.func @transform_7(%arg0: i32, %arg1: i32) -> (i32, i32, i32) {
    %c0_i32 = arith.constant 0 : i32
    %c0_i32_0 = arith.constant 0 : i32
    %c0_i32_1 = arith.constant 0 : i32
    return %arg1, %c0_i32, %c0_i32_0 : i32, i32, i32
  }
  func.func @transform_8(%arg0: i32, %arg1: i32) -> (i32, i32, i32) {
    %c0_i32 = arith.constant 0 : i32
    %c0_i32_0 = arith.constant 0 : i32
    %c0_i32_1 = arith.constant 0 : i32
    return %arg1, %c0_i32, %c0_i32_0 : i32, i32, i32
  }
  func.func @transform_9(%arg0: i32, %arg1: i32) -> (i32, i32, i32) {
    %c0_i32 = arith.constant 0 : i32
    %c0_i32_0 = arith.constant 0 : i32
    %c0_i32_1 = arith.constant 0 : i32
    return %arg1, %c0_i32, %c0_i32_0 : i32, i32, i32
  }
  func.func @transform_10(%arg0: i32, %arg1: i32) -> (i32, i32, i32) {
    %c0_i32 = arith.constant 0 : i32
    %c0_i32_0 = arith.constant 0 : i32
    %c0_i32_1 = arith.constant 0 : i32
    return %arg1, %c0_i32, %c0_i32_0 : i32, i32, i32
  }
  func.func @transform_11(%arg0: i32, %arg1: i32) -> (i32, i32, i32) {
    %c0_i32 = arith.constant 0 : i32
    %c0_i32_0 = arith.constant 0 : i32
    %c0_i32_1 = arith.constant 0 : i32
    return %arg1, %c0_i32, %c0_i32_0 : i32, i32, i32
  }
  func.func @transform_12(%arg0: i32, %arg1: i32) -> (i32, i32, i32) {
    %c0_i32 = arith.constant 0 : i32
    %c0_i32_0 = arith.constant 0 : i32
    %c0_i32_1 = arith.constant 0 : i32
    return %arg1, %c0_i32, %c0_i32_0 : i32, i32, i32
  }
  func.func @transform_13(%arg0: i32, %arg1: i32) -> (i32, i32, i32) {
    %c0_i32 = arith.constant 0 : i32
    %c0_i32_0 = arith.constant 0 : i32
    %c0_i32_1 = arith.constant 0 : i32
    return %arg1, %c0_i32, %c0_i32_0 : i32, i32, i32
  }
  func.func @transform_14(%arg0: i32, %arg1: i32) -> (i32, i32, i32) {
    %c0_i32 = arith.constant 0 : i32
    %c0_i32_0 = arith.constant 0 : i32
    %c0_i32_1 = arith.constant 0 : i32
    return %arg1, %c0_i32, %c0_i32_0 : i32, i32, i32
  }
  func.func @transform_15(%arg0: i32, %arg1: i32) -> (i32, i32, i32) {
    %c0_i32 = arith.constant 0 : i32
    %c0_i32_0 = arith.constant 0 : i32
    %c0_i32_1 = arith.constant 0 : i32
    return %arg1, %c0_i32, %c0_i32_0 : i32, i32, i32
  }
  func.func @transform_16(%arg0: i32, %arg1: i32) -> (i32, i32) {
    %c0_i32 = arith.constant 0 : i32
    %c0_i32_0 = arith.constant 0 : i32
    %c0_i32_1 = arith.constant 0 : i32
    return %c0_i32, %c0_i32_0 : i32, i32
  }
  func.func @transform_17(%arg0: i32, %arg1: i32) -> (i32, i32) {
    %c0_i32 = arith.constant 0 : i32
    %c0_i32_0 = arith.constant 0 : i32
    %c0_i32_1 = arith.constant 0 : i32
    return %c0_i32, %c0_i32_0 : i32, i32
  }
  func.func @transform_18(%arg0: i32, %arg1: i32) -> (i32, i32) {
    %c0_i32 = arith.constant 0 : i32
    %c0_i32_0 = arith.constant 0 : i32
    %c0_i32_1 = arith.constant 0 : i32
    return %c0_i32, %c0_i32_0 : i32, i32
  }
  func.func @transform_19(%arg0: i32, %arg1: i32) -> (i32, i32, i32) {
    %c0_i32 = arith.constant 0 : i32
    %c0_i32_0 = arith.constant 0 : i32
    %c0_i32_1 = arith.constant 0 : i32
    return %arg0, %c0_i32, %c0_i32_0 : i32, i32, i32
  }
}

</mosaic_0001>

<llo_original>
// kernel: tpu_custom_call.1
$region0: #{tpu_custom_call.1}
  #allocation0 [shape = 'u32[]', space=smem, size = 0x4, offset = 0x4, fixed_abs, tag = 'smem constant byte address 0x4 - core index']
  #allocation1 [shape = 'u32[144,128]{1,0:T(1,128)}', space=vmem, size = 0x12000, scoped, tag = 'internal scratch']
  #allocation2 [shape = 'f32[8,32]{1,0:T(8,128)}', space=vmem, size = 0x1000, scoped, tag = 'scratch operand']
  %s0 = inlined_call_operand.hbm [shape: f32[2,1,8], index: 0, kind: input, shape index: {}]
  %s1 = inlined_call_operand.vmem [shape: f32[2,8,32], index: 1, kind: input, shape index: {}]
  %s2 = inlined_call_operand.vmem [shape: f32[1,32], index: 2, kind: input, shape index: {}]
  %s3 = inlined_call_operand.hbm [shape: f32[1,32], index: 3, kind: input, shape index: {}]
  %s4 = inlined_call_operand.vmem [shape: bf16[2,32,96], index: 4, kind: input, shape index: {}]
  %s5 = inlined_call_operand.hbm [shape: f32[2,1,96], index: 5, kind: input, shape index: {}]
  %s6 = inlined_call_operand.vmem [shape: bf16[2,32,32], index: 6, kind: input, shape index: {}]
  %s7 = inlined_call_operand.hbm [shape: f32[2,1,32], index: 7, kind: input, shape index: {}]
  %s8 = inlined_call_operand.hbm [shape: f32[2,1,32], index: 8, kind: input, shape index: {}]
  %s9 = inlined_call_operand.hbm [shape: f32[2,1,32], index: 9, kind: input, shape index: {}]
  %s10 = inlined_call_operand.vmem [shape: bf16[2,32,64], index: 10, kind: input, shape index: {}]
  %s11 = inlined_call_operand.hbm [shape: f32[2,1,64], index: 11, kind: input, shape index: {}]
  %s12 = inlined_call_operand.vmem [shape: bf16[2,64,32], index: 12, kind: input, shape index: {}]
  %s13 = inlined_call_operand.hbm [shape: f32[2,1,32], index: 13, kind: input, shape index: {}]
  %s14 = inlined_call_operand.vmem [shape: f32[2,1,32], index: 14, kind: input, shape index: {}]
  %s15 = inlined_call_operand.vmem [shape: f32[2,1,32], index: 15, kind: input, shape index: {}]
  %s16 = inlined_call_operand.vmem [shape: bf16[32,32], index: 16, kind: input, shape index: {}]
  %s17 = inlined_call_operand.vmem [shape: f32[1,32], index: 17, kind: input, shape index: {}]
  %s18 = inlined_call_operand.vmem [shape: bf16[32,16], index: 18, kind: input, shape index: {}]
  %s19 = inlined_call_operand.hbm [shape: f32[2,1,16], index: 19, kind: output, shape index: {}]
  %s20 = sld [smem:[#allocation0]]
  $region149: #{tpu_custom_call.1} parent=0
    _
  %s22 = ssub.s32 1, %s20
  %s23 = scalar_select 0, %s22, %s20
  $region1: #{tpu_custom_call.1} parent=0
    #allocation3 [shape = 'u8[1024]{0}', space=vmem, size = 0x400, scoped, tag = 'input window, operand 0']
    #allocation4 [shape = 's32[2]{0}', space=sflag, size = 0x8, scoped, tag = 'scoped memory for tpu_custom_call.1']
    #allocation5 [shape = 's32[2]{0}', space=sflag, size = 0x8, scoped, tag = 'scoped memory for tpu_custom_call.1']
    #allocation6 [shape = 'u8[512]{0}', space=vmem, size = 0x400, scoped, tag = 'input window, operand 3, single buffered']
    #allocation7 [shape = 's32[1]{0}', space=sflag, size = 0x4, scoped, tag = 'scoped memory for tpu_custom_call.1']
    #allocation8 [shape = 'u8[1024]{0}', space=vmem, size = 0x400, scoped, tag = 'input window, operand 5']
    #allocation9 [shape = 'u8[1024]{0}', space=vmem, size = 0x400, scoped, tag = 'input window, operand 7']
    #allocation10 [shape = 'u8[1024]{0}', space=vmem, size = 0x400, scoped, tag = 'input window, operand 8']
    #allocation11 [shape = 'u8[1024]{0}', space=vmem, size = 0x400, scoped, tag = 'input window, operand 9']
    #allocation12 [shape = 'u8[1024]{0}', space=vmem, size = 0x400, scoped, tag = 'input window, operand 11']
    #allocation13 [shape = 'u8[1024]{0}', space=vmem, size = 0x400, scoped, tag = 'input window, operand 13']
    #allocation14 [shape = 'u8[1024]{0}', space=vmem, size = 0x400, scoped, tag = 'output window, operand 0']
    %24 = vsyncpa [#allocation4], 0
    %s25 = scalar_lea.sflag [#allocation4], 1
    %26 = vsyncpa %s25, 0
    %27 = vsyncpa [#allocation7], 0
    %28 = vsyncpa [#allocation5], 0
    %s29 = scalar_lea.sflag [#allocation5], 1
    %30 = vsyncpa %s29, 0
    loop: start=0, step=1, limit=6
    $region2: #{tpu_custom_call.1} parent=1 // loop_pre_header
      _
    $region3: #{tpu_custom_call.1} parent=1 // loop_header
      %s32 = sphi 0, %s36
      %p33 = scmp.ge.s32.totalorder %s32, 6
      %s39 = sphi 0, %s51
      %s40 = sphi 0, %s47
      %s41 = sphi 0, %s39
      %s42 = sphi 0, %s40
      %s43 = sphi 0, %s41
      %s44 = sphi 0, %s42
      %s54 = sphi 0, %s56
      %s57 = sphi 0, %s54
      %s58 = sphi 0, %s57
      %s74 = sphi 0, %s58
      %s80 = sphi 0, %s82
      %s83 = sphi 0, %s80
      %s84 = sphi 0, %s83
      %s100 = sphi 0, %s84
      %s104 = sphi 0, %s104
      %s106 = sphi 0, %s104
      %s107 = sphi 0, %s106
      %s121 = sphi 0, %s107
      %s125 = sphi 0, %s125
      %s127 = sphi 0, %s125
      %s128 = sphi 0, %s127
      %s142 = sphi 0, %s128
      %s148 = sphi 0, %s150
      %s151 = sphi 0, %s148
      %s152 = sphi 0, %s151
      %s168 = sphi 0, %s152
      %s174 = sphi 0, %s176
      %s177 = sphi 0, %s174
      %s178 = sphi 0, %s177
      %s194 = sphi 0, %s178
      %s200 = sphi 0, %s202
      %s203 = sphi 0, %s200
      %s204 = sphi 0, %s203
      %s220 = sphi 0, %s204
      %s226 = sphi 0, %s228
      %s229 = sphi 0, %s226
      %s230 = sphi 0, %s229
      %s246 = sphi 0, %s230
      %s252 = sphi 0, %s254
      %s255 = sphi 0, %s252
      %s256 = sphi 0, %s255
      %s272 = sphi 0, %s256
      %s278 = sphi 0, %s280
      %s281 = sphi 0, %s278
      %s282 = sphi 0, %s281
      %s298 = sphi 0, %s282
      %s304 = sphi 0, %s306
      %s307 = sphi 0, %s304
      %s308 = sphi 0, %s307
      %s324 = sphi 0, %s308
      %s330 = sphi 0, %s332
      %s333 = sphi 0, %s330
      %s334 = sphi 0, %s333
      %s350 = sphi 0, %s334
      %s356 = sphi 0, %s358
      %s359 = sphi 0, %s356
      %s360 = sphi 0, %s359
      %s376 = sphi 0, %s360
      %s382 = sphi 0, %s384
      %s385 = sphi 0, %s382
      %s386 = sphi 0, %s385
      %s402 = sphi 0, %s386
      %s408 = sphi 0, %s410
      %s411 = sphi 0, %s408
      %s412 = sphi 0, %s411
      %s428 = sphi 0, %s412
      %s434 = sphi 0, %s436
      %s437 = sphi 0, %s434
      %s438 = sphi 0, %s437
      %s454 = sphi 0, %s438
      %s458 = sphi 0, %s458
      %s460 = sphi 0, %s458
      %s461 = sphi 0, %s460
      %s475 = sphi 0, %s461
      %s479 = sphi 0, %s479
      %s481 = sphi 0, %s479
      %s482 = sphi 0, %s481
      %s496 = sphi 0, %s482
      %s500 = sphi 0, %s500
      %s502 = sphi 0, %s500
      %s503 = sphi 0, %s502
      %s517 = sphi 0, %s503
      %s523 = sphi 0, %s525
      %s526 = sphi 0, %s523
      %s527 = sphi 0, %s526
      %s543 = sphi 0, %s527
    $region4: #{tpu_custom_call.1} parent=1 // loop_header_branch
      %35 = sbr.rel (%p33) target = $region8
    $region5: #{tpu_custom_call.1} parent=1 // loop_body
      %s37 = ssub.s32 %s32, 1
      %s38 = ssub.s32 %s32, 2
      %s45 = sadd.s32 1, %s40
      %p46 = scmp.ge.s32.totalorder %s45, 2
      %s47 = scalar_select %p46, 0, %s45
      %s48 = sadd.s32 1, %s39
      %s49 = scalar_select %p46, %s48, %s39
      %p50 = scmp.ge.s32.totalorder %s49, 2
      %s51 = scalar_select %p50, 0, %s49
      %s52 = ssub.s32 %s39, %s51
      %p53 = scmp.eq.s32.totalorder %s52, 0
      %s55 = sadd.s32 %s54, 1
      %s56 = scalar_select %p53, %s54, %s55
      %p59 = pneg %p53
      %p60 = scmp.eq.s32.totalorder %s32, 3
      %p61 = por %p59, %p60
      %p62 = scmp.ne.s32.totalorder %s54, %s57
      %p63 = scmp.eq.s32.totalorder %s32, 0
      %p64 = por %p62, %p63
      %p65 = scmp.ne.s32.totalorder %s54, %s57
      %p66 = scmp.eq.s32.totalorder %s37, 3
      %p67 = por %p65, %p66
      %p68 = scmp.ne.s32.totalorder %s57, %s58
      %p69 = scmp.eq.s32.totalorder %s37, 0
      %p70 = por %p68, %p69
      %p71 = scmp.ne.s32.totalorder %s57, %s58
      %p72 = scmp.eq.s32.totalorder %s38, 3
      %p73 = por %p71, %p72
      %p75 = scmp.ne.s32.totalorder %s58, %s74
      %p76 = scmp.eq.s32.totalorder %s38, 0
      %p77 = por %p75, %p76
      %s78 = ssub.s32 %s39, %s51
      %p79 = scmp.eq.s32.totalorder %s78, 0
      %s81 = sadd.s32 %s80, 1
      %s82 = scalar_select %p79, %s80, %s81
      %p85 = pneg %p79
      %p86 = scmp.eq.s32.totalorder %s32, 3
      %p87 = por %p85, %p86
      %p88 = scmp.ne.s32.totalorder %s80, %s83
      %p89 = scmp.eq.s32.totalorder %s32, 0
      %p90 = por %p88, %p89
      %p91 = scmp.ne.s32.totalorder %s80, %s83
      %p92 = scmp.eq.s32.totalorder %s37, 3
      %p93 = por %p91, %p92
      %p94 = scmp.ne.s32.totalorder %s83, %s84
      %p95 = scmp.eq.s32.totalorder %s37, 0
      %p96 = por %p94, %p95
      %p97 = scmp.ne.s32.totalorder %s83, %s84
      %p98 = scmp.eq.s32.totalorder %s38, 3
      %p99 = por %p97, %p98
      %p101 = scmp.ne.s32.totalorder %s84, %s100
      %p102 = scmp.eq.s32.totalorder %s38, 0
      %p103 = por %p101, %p102
      %s105 = sadd.s32 %s104, 1
      %p108 = scmp.eq.s32.totalorder %s32, 3
      %p109 = scmp.ne.s32.totalorder %s104, %s106
      %p110 = scmp.eq.s32.totalorder %s32, 0
      %p111 = por %p109, %p110
      %p112 = scmp.ne.s32.totalorder %s104, %s106
      %p113 = scmp.eq.s32.totalorder %s37, 3
      %p114 = por %p112, %p113
      %p115 = scmp.ne.s32.totalorder %s106, %s107
      %p116 = scmp.eq.s32.totalorder %s37, 0
      %p117 = por %p115, %p116
      %p118 = scmp.ne.s32.totalorder %s106, %s107
      %p119 = scmp.eq.s32.totalorder %s38, 3
      %p120 = por %p118, %p119
      %p122 = scmp.ne.s32.totalorder %s107, %s121
      %p123 = scmp.eq.s32.totalorder %s38, 0
      %p124 = por %p122, %p123
      %s126 = sadd.s32 %s125, 1
      %p129 = scmp.eq.s32.totalorder %s32, 3
      %p130 = scmp.ne.s32.totalorder %s125, %s127
      %p131 = scmp.eq.s32.totalorder %s32, 0
      %p132 = por %p130, %p131
      %p133 = scmp.ne.s32.totalorder %s125, %s127
      %p134 = scmp.eq.s32.totalorder %s37, 3
      %p135 = por %p133, %p134
      %p136 = scmp.ne.s32.totalorder %s127, %s128
      %p137 = scmp.eq.s32.totalorder %s37, 0
      %p138 = por %p136, %p137
      %p139 = scmp.ne.s32.totalorder %s127, %s128
      %p140 = scmp.eq.s32.totalorder %s38, 3
      %p141 = por %p139, %p140
      %p143 = scmp.ne.s32.totalorder %s128, %s142
      %p144 = scmp.eq.s32.totalorder %s38, 0
      %p145 = por %p143, %p144
      %s146 = ssub.s32 %s40, %s47
      %p147 = scmp.eq.s32.totalorder %s146, 0
      %s149 = sadd.s32 %s148, 1
      %s150 = scalar_select %p147, %s148, %s149
      %p153 = pneg %p147
      %p154 = scmp.eq.s32.totalorder %s32, 3
      %p155 = por %p153, %p154
      %p156 = scmp.ne.s32.totalorder %s148, %s151
      %p157 = scmp.eq.s32.totalorder %s32, 0
      %p158 = por %p156, %p157
      %p159 = scmp.ne.s32.totalorder %s148, %s151
      %p160 = scmp.eq.s32.totalorder %s37, 3
      %p161 = por %p159, %p160
      %p162 = scmp.ne.s32.totalorder %s151, %s152
      %p163 = scmp.eq.s32.totalorder %s37, 0
      %p164 = por %p162, %p163
      %p165 = scmp.ne.s32.totalorder %s151, %s152
      %p166 = scmp.eq.s32.totalorder %s38, 3
      %p167 = por %p165, %p166
      %p169 = scmp.ne.s32.totalorder %s152, %s168
      %p170 = scmp.eq.s32.totalorder %s38, 0
      %p171 = por %p169, %p170
      %s172 = ssub.s32 %s40, %s47
      %p173 = scmp.eq.s32.totalorder %s172, 0
      %s175 = sadd.s32 %s174, 1
      %s176 = scalar_select %p173, %s174, %s175
      %p179 = pneg %p173
      %p180 = scmp.eq.s32.totalorder %s32, 3
      %p181 = por %p179, %p180
      %p182 = scmp.ne.s32.totalorder %s174, %s177
      %p183 = scmp.eq.s32.totalorder %s32, 0
      %p184 = por %p182, %p183
      %p185 = scmp.ne.s32.totalorder %s174, %s177
      %p186 = scmp.eq.s32.totalorder %s37, 3
      %p187 = por %p185, %p186
      %p188 = scmp.ne.s32.totalorder %s177, %s178
      %p189 = scmp.eq.s32.totalorder %s37, 0
      %p190 = por %p188, %p189
      %p191 = scmp.ne.s32.totalorder %s177, %s178
      %p192 = scmp.eq.s32.totalorder %s38, 3
      %p193 = por %p191, %p192
      %p195 = scmp.ne.s32.totalorder %s178, %s194
      %p196 = scmp.eq.s32.totalorder %s38, 0
      %p197 = por %p195, %p196
      %s198 = ssub.s32 %s40, %s47
      %p199 = scmp.eq.s32.totalorder %s198, 0
      %s201 = sadd.s32 %s200, 1
      %s202 = scalar_select %p199, %s200, %s201
      %p205 = pneg %p199
      %p206 = scmp.eq.s32.totalorder %s32, 3
      %p207 = por %p205, %p206
      %p208 = scmp.ne.s32.totalorder %s200, %s203
      %p209 = scmp.eq.s32.totalorder %s32, 0
      %p210 = por %p208, %p209
      %p211 = scmp.ne.s32.totalorder %s200, %s203
      %p212 = scmp.eq.s32.totalorder %s37, 3
      %p213 = por %p211, %p212
      %p214 = scmp.ne.s32.totalorder %s203, %s204
      %p215 = scmp.eq.s32.totalorder %s37, 0
      %p216 = por %p214, %p215
      %p217 = scmp.ne.s32.totalorder %s203, %s204
      %p218 = scmp.eq.s32.totalorder %s38, 3
      %p219 = por %p217, %p218
      %p221 = scmp.ne.s32.totalorder %s204, %s220
      %p222 = scmp.eq.s32.totalorder %s38, 0
      %p223 = por %p221, %p222
      %s224 = ssub.s32 %s40, %s47
      %p225 = scmp.eq.s32.totalorder %s224, 0
      %s227 = sadd.s32 %s226, 1
      %s228 = scalar_select %p225, %s226, %s227
      %p231 = pneg %p225
      %p232 = scmp.eq.s32.totalorder %s32, 3
      %p233 = por %p231, %p232
      %p234 = scmp.ne.s32.totalorder %s226, %s229
      %p235 = scmp.eq.s32.totalorder %s32, 0
      %p236 = por %p234, %p235
      %p237 = scmp.ne.s32.totalorder %s226, %s229
      %p238 = scmp.eq.s32.totalorder %s37, 3
      %p239 = por %p237, %p238
      %p240 = scmp.ne.s32.totalorder %s229, %s230
      %p241 = scmp.eq.s32.totalorder %s37, 0
      %p242 = por %p240, %p241
      %p243 = scmp.ne.s32.totalorder %s229, %s230
      %p244 = scmp.eq.s32.totalorder %s38, 3
      %p245 = por %p243, %p244
      %p247 = scmp.ne.s32.totalorder %s230, %s246
      %p248 = scmp.eq.s32.totalorder %s38, 0
      %p249 = por %p247, %p248
      %s250 = ssub.s32 %s40, %s47
      %p251 = scmp.eq.s32.totalorder %s250, 0
      %s253 = sadd.s32 %s252, 1
      %s254 = scalar_select %p251, %s252, %s253
      %p257 = pneg %p251
      %p258 = scmp.eq.s32.totalorder %s32, 3
      %p259 = por %p257, %p258
      %p260 = scmp.ne.s32.totalorder %s252, %s255
      %p261 = scmp.eq.s32.totalorder %s32, 0
      %p262 = por %p260, %p261
      %p263 = scmp.ne.s32.totalorder %s252, %s255
      %p264 = scmp.eq.s32.totalorder %s37, 3
      %p265 = por %p263, %p264
      %p266 = scmp.ne.s32.totalorder %s255, %s256
      %p267 = scmp.eq.s32.totalorder %s37, 0
      %p268 = por %p266, %p267
      %p269 = scmp.ne.s32.totalorder %s255, %s256
      %p270 = scmp.eq.s32.totalorder %s38, 3
      %p271 = por %p269, %p270
      %p273 = scmp.ne.s32.totalorder %s256, %s272
      %p274 = scmp.eq.s32.totalorder %s38, 0
      %p275 = por %p273, %p274
      %s276 = ssub.s32 %s40, %s47
      %p277 = scmp.eq.s32.totalorder %s276, 0
      %s279 = sadd.s32 %s278, 1
      %s280 = scalar_select %p277, %s278, %s279
      %p283 = pneg %p277
      %p284 = scmp.eq.s32.totalorder %s32, 3
      %p285 = por %p283, %p284
      %p286 = scmp.ne.s32.totalorder %s278, %s281
      %p287 = scmp.eq.s32.totalorder %s32, 0
      %p288 = por %p286, %p287
      %p289 = scmp.ne.s32.totalorder %s278, %s281
      %p290 = scmp.eq.s32.totalorder %s37, 3
      %p291 = por %p289, %p290
      %p292 = scmp.ne.s32.totalorder %s281, %s282
      %p293 = scmp.eq.s32.totalorder %s37, 0
      %p294 = por %p292, %p293
      %p295 = scmp.ne.s32.totalorder %s281, %s282
      %p296 = scmp.eq.s32.totalorder %s38, 3
      %p297 = por %p295, %p296
      %p299 = scmp.ne.s32.totalorder %s282, %s298
      %p300 = scmp.eq.s32.totalorder %s38, 0
      %p301 = por %p299, %p300
      %s302 = ssub.s32 %s40, %s47
      %p303 = scmp.eq.s32.totalorder %s302, 0
      %s305 = sadd.s32 %s304, 1
      %s306 = scalar_select %p303, %s304, %s305
      %p309 = pneg %p303
      %p310 = scmp.eq.s32.totalorder %s32, 3
      %p311 = por %p309, %p310
      %p312 = scmp.ne.s32.totalorder %s304, %s307
      %p313 = scmp.eq.s32.totalorder %s32, 0
      %p314 = por %p312, %p313
      %p315 = scmp.ne.s32.totalorder %s304, %s307
      %p316 = scmp.eq.s32.totalorder %s37, 3
      %p317 = por %p315, %p316
      %p318 = scmp.ne.s32.totalorder %s307, %s308
      %p319 = scmp.eq.s32.totalorder %s37, 0
      %p320 = por %p318, %p319
      %p321 = scmp.ne.s32.totalorder %s307, %s308
      %p322 = scmp.eq.s32.totalorder %s38, 3
      %p323 = por %p321, %p322
      %p325 = scmp.ne.s32.totalorder %s308, %s324
      %p326 = scmp.eq.s32.totalorder %s38, 0
      %p327 = por %p325, %p326
      %s328 = ssub.s32 %s40, %s47
      %p329 = scmp.eq.s32.totalorder %s328, 0
      %s331 = sadd.s32 %s330, 1
      %s332 = scalar_select %p329, %s330, %s331
      %p335 = pneg %p329
      %p336 = scmp.eq.s32.totalorder %s32, 3
      %p337 = por %p335, %p336
      %p338 = scmp.ne.s32.totalorder %s330, %s333
      %p339 = scmp.eq.s32.totalorder %s32, 0
      %p340 = por %p338, %p339
      %p341 = scmp.ne.s32.totalorder %s330, %s333
      %p342 = scmp.eq.s32.totalorder %s37, 3
      %p343 = por %p341, %p342
      %p344 = scmp.ne.s32.totalorder %s333, %s334
      %p345 = scmp.eq.s32.totalorder %s37, 0
      %p346 = por %p344, %p345
      %p347 = scmp.ne.s32.totalorder %s333, %s334
      %p348 = scmp.eq.s32.totalorder %s38, 3
      %p349 = por %p347, %p348
      %p351 = scmp.ne.s32.totalorder %s334, %s350
      %p352 = scmp.eq.s32.totalorder %s38, 0
      %p353 = por %p351, %p352
      %s354 = ssub.s32 %s40, %s47
      %p355 = scmp.eq.s32.totalorder %s354, 0
      %s357 = sadd.s32 %s356, 1
      %s358 = scalar_select %p355, %s356, %s357
      %p361 = pneg %p355
      %p362 = scmp.eq.s32.totalorder %s32, 3
      %p363 = por %p361, %p362
      %p364 = scmp.ne.s32.totalorder %s356, %s359
      %p365 = scmp.eq.s32.totalorder %s32, 0
      %p366 = por %p364, %p365
      %p367 = scmp.ne.s32.totalorder %s356, %s359
      %p368 = scmp.eq.s32.totalorder %s37, 3
      %p369 = por %p367, %p368
      %p370 = scmp.ne.s32.totalorder %s359, %s360
      %p371 = scmp.eq.s32.totalorder %s37, 0
      %p372 = por %p370, %p371
      %p373 = scmp.ne.s32.totalorder %s359, %s360
      %p374 = scmp.eq.s32.totalorder %s38, 3
      %p375 = por %p373, %p374
      %p377 = scmp.ne.s32.totalorder %s360, %s376
      %p378 = scmp.eq.s32.totalorder %s38, 0
      %p379 = por %p377, %p378
      %s380 = ssub.s32 %s40, %s47
      %p381 = scmp.eq.s32.totalorder %s380, 0
      %s383 = sadd.s32 %s382, 1
      %s384 = scalar_select %p381, %s382, %s383
      %p387 = pneg %p381
      %p388 = scmp.eq.s32.totalorder %s32, 3
      %p389 = por %p387, %p388
      %p390 = scmp.ne.s32.totalorder %s382, %s385
      %p391 = scmp.eq.s32.totalorder %s32, 0
      %p392 = por %p390, %p391
      %p393 = scmp.ne.s32.totalorder %s382, %s385
      %p394 = scmp.eq.s32.totalorder %s37, 3
      %p395 = por %p393, %p394
      %p396 = scmp.ne.s32.totalorder %s385, %s386
      %p397 = scmp.eq.s32.totalorder %s37, 0
      %p398 = por %p396, %p397
      %p399 = scmp.ne.s32.totalorder %s385, %s386
      %p400 = scmp.eq.s32.totalorder %s38, 3
      %p401 = por %p399, %p400
      %p403 = scmp.ne.s32.totalorder %s386, %s402
      %p404 = scmp.eq.s32.totalorder %s38, 0
      %p405 = por %p403, %p404
      %s406 = ssub.s32 %s40, %s47
      %p407 = scmp.eq.s32.totalorder %s406, 0
      %s409 = sadd.s32 %s408, 1
      %s410 = scalar_select %p407, %s408, %s409
      %p413 = pneg %p407
      %p414 = scmp.eq.s32.totalorder %s32, 3
      %p415 = por %p413, %p414
      %p416 = scmp.ne.s32.totalorder %s408, %s411
      %p417 = scmp.eq.s32.totalorder %s32, 0
      %p418 = por %p416, %p417
      %p419 = scmp.ne.s32.totalorder %s408, %s411
      %p420 = scmp.eq.s32.totalorder %s37, 3
      %p421 = por %p419, %p420
      %p422 = scmp.ne.s32.totalorder %s411, %s412
      %p423 = scmp.eq.s32.totalorder %s37, 0
      %p424 = por %p422, %p423
      %p425 = scmp.ne.s32.totalorder %s411, %s412
      %p426 = scmp.eq.s32.totalorder %s38, 3
      %p427 = por %p425, %p426
      %p429 = scmp.ne.s32.totalorder %s412, %s428
      %p430 = scmp.eq.s32.totalorder %s38, 0
      %p431 = por %p429, %p430
      %s432 = ssub.s32 %s40, %s47
      %p433 = scmp.eq.s32.totalorder %s432, 0
      %s435 = sadd.s32 %s434, 1
      %s436 = scalar_select %p433, %s434, %s435
      %p439 = pneg %p433
      %p440 = scmp.eq.s32.totalorder %s32, 3
      %p441 = por %p439, %p440
      %p442 = scmp.ne.s32.totalorder %s434, %s437
      %p443 = scmp.eq.s32.totalorder %s32, 0
      %p444 = por %p442, %p443
      %p445 = scmp.ne.s32.totalorder %s434, %s437
      %p446 = scmp.eq.s32.totalorder %s37, 3
      %p447 = por %p445, %p446
      %p448 = scmp.ne.s32.totalorder %s437, %s438
      %p449 = scmp.eq.s32.totalorder %s37, 0
      %p450 = por %p448, %p449
      %p451 = scmp.ne.s32.totalorder %s437, %s438
      %p452 = scmp.eq.s32.totalorder %s38, 3
      %p453 = por %p451, %p452
      %p455 = scmp.ne.s32.totalorder %s438, %s454
      %p456 = scmp.eq.s32.totalorder %s38, 0
      %p457 = por %p455, %p456
      %s459 = sadd.s32 %s458, 1
      %p462 = scmp.eq.s32.totalorder %s32, 3
      %p463 = scmp.ne.s32.totalorder %s458, %s460
      %p464 = scmp.eq.s32.totalorder %s32, 0
      %p465 = por %p463, %p464
      %p466 = scmp.ne.s32.totalorder %s458, %s460
      %p467 = scmp.eq.s32.totalorder %s37, 3
      %p468 = por %p466, %p467
      %p469 = scmp.ne.s32.totalorder %s460, %s461
      %p470 = scmp.eq.s32.totalorder %s37, 0
      %p471 = por %p469, %p470
      %p472 = scmp.ne.s32.totalorder %s460, %s461
      %p473 = scmp.eq.s32.totalorder %s38, 3
      %p474 = por %p472, %p473
      %p476 = scmp.ne.s32.totalorder %s461, %s475
      %p477 = scmp.eq.s32.totalorder %s38, 0
      %p478 = por %p476, %p477
      %s480 = sadd.s32 %s479, 1
      %p483 = scmp.eq.s32.totalorder %s32, 3
      %p484 = scmp.ne.s32.totalorder %s479, %s481
      %p485 = scmp.eq.s32.totalorder %s32, 0
      %p486 = por %p484, %p485
      %p487 = scmp.ne.s32.totalorder %s479, %s481
      %p488 = scmp.eq.s32.totalorder %s37, 3
      %p489 = por %p487, %p488
      %p490 = scmp.ne.s32.totalorder %s481, %s482
      %p491 = scmp.eq.s32.totalorder %s37, 0
      %p492 = por %p490, %p491
      %p493 = scmp.ne.s32.totalorder %s481, %s482
      %p494 = scmp.eq.s32.totalorder %s38, 3
      %p495 = por %p493, %p494
      %p497 = scmp.ne.s32.totalorder %s482, %s496
      %p498 = scmp.eq.s32.totalorder %s38, 0
      %p499 = por %p497, %p498
      %s501 = sadd.s32 %s500, 1
      %p504 = scmp.eq.s32.totalorder %s32, 3
      %p505 = scmp.ne.s32.totalorder %s500, %s502
      %p506 = scmp.eq.s32.totalorder %s32, 0
      %p507 = por %p505, %p506
      %p508 = scmp.ne.s32.totalorder %s500, %s502
      %p509 = scmp.eq.s32.totalorder %s37, 3
      %p510 = por %p508, %p509
      %p511 = scmp.ne.s32.totalorder %s502, %s503
      %p512 = scmp.eq.s32.totalorder %s37, 0
      %p513 = por %p511, %p512
      %p514 = scmp.ne.s32.totalorder %s502, %s503
      %p515 = scmp.eq.s32.totalorder %s38, 3
      %p516 = por %p514, %p515
      %p518 = scmp.ne.s32.totalorder %s503, %s517
      %p519 = scmp.eq.s32.totalorder %s38, 0
      %p520 = por %p518, %p519
      %s521 = ssub.s32 %s39, %s51
      %p522 = scmp.eq.s32.totalorder %s521, 0
      %s524 = sadd.s32 %s523, 1
      %s525 = scalar_select %p522, %s523, %s524
      %p528 = pneg %p522
      %p529 = scmp.eq.s32.totalorder %s32, 3
      %p530 = por %p528, %p529
      %p531 = scmp.ne.s32.totalorder %s523, %s526
      %p532 = scmp.eq.s32.totalorder %s32, 0
      %p533 = por %p531, %p532
      %p534 = scmp.ne.s32.totalorder %s523, %s526
      %p535 = scmp.eq.s32.totalorder %s37, 3
      %p536 = por %p534, %p535
      %p537 = scmp.ne.s32.totalorder %s526, %s527
      %p538 = scmp.eq.s32.totalorder %s37, 0
      %p539 = por %p537, %p538
      %p540 = scmp.ne.s32.totalorder %s526, %s527
      %p541 = scmp.eq.s32.totalorder %s38, 3
      %p542 = por %p540, %p541
      %p544 = scmp.ne.s32.totalorder %s527, %s543
      %p545 = scmp.eq.s32.totalorder %s38, 0
      %p546 = por %p544, %p545
      %p547 = scmp.le.s32.totalorder 1, %s32
      %p548 = scmp.lt.s32.totalorder %s32, 5
      %p549 = pnand %p547, %p548
      %p550 = pneg %p549
      // Predicated region
      $region9: #{tpu_custom_call.1} parent=5 // pred_check
        _
      $region10: #{tpu_custom_call.1} parent=5 // pred_check_branch
        %552 = sbr.rel (%p549) target = $region12
      $region11: #{tpu_custom_call.1} parent=5 // pred_region
        %s553 = ssub.s32 %s32, 1
        // Predicated region
        $region13: #{tpu_custom_call.1} parent=11 // pred_check
          %p554 = pneg %p117
        $region14: #{tpu_custom_call.1} parent=11 // pred_check_branch
          %556 = sbr.rel (%p554) target = $region16
        $region15: #{tpu_custom_call.1} parent=11 // pred_region
          _
        $region16: #{tpu_custom_call.1} parent=11 // pred_fallthru
          _
        // Predicated region
        $region17: #{tpu_custom_call.1} parent=11 // pred_check
          %p557 = pneg %p138
        $region18: #{tpu_custom_call.1} parent=11 // pred_check_branch
          %559 = sbr.rel (%p557) target = $region20
        $region19: #{tpu_custom_call.1} parent=11 // pred_region
          %s561 = ssub.s32 16, 16
          %562 = vsyncadd [#allocation7], %s561
          %s564 = sshll.u32 [#allocation6], 4
          %s565 = int_to_ptr.vmem [resolvable:$true] %s564
          %567 = dma.hbm_to_vmem [thread:$0]  %s3, 16, %s565, [#allocation7]
        $region20: #{tpu_custom_call.1} parent=11 // pred_fallthru
          _
        // Predicated region
        $region21: #{tpu_custom_call.1} parent=11 // pred_check
          %p568 = pneg %p471
        $region22: #{tpu_custom_call.1} parent=11 // pred_check_branch
          %570 = sbr.rel (%p568) target = $region24
        $region23: #{tpu_custom_call.1} parent=11 // pred_region
          _
        $region24: #{tpu_custom_call.1} parent=11 // pred_fallthru
          _
        // Predicated region
        $region25: #{tpu_custom_call.1} parent=11 // pred_check
          %p571 = pneg %p492
        $region26: #{tpu_custom_call.1} parent=11 // pred_check_branch
          %573 = sbr.rel (%p571) target = $region28
        $region27: #{tpu_custom_call.1} parent=11 // pred_region
          _
        $region28: #{tpu_custom_call.1} parent=11 // pred_fallthru
          _
        // Predicated region
        $region29: #{tpu_custom_call.1} parent=11 // pred_check
          %p574 = pneg %p513
        $region30: #{tpu_custom_call.1} parent=11 // pred_check_branch
          %576 = sbr.rel (%p574) target = $region32
        $region31: #{tpu_custom_call.1} parent=11 // pred_region
          _
        $region32: #{tpu_custom_call.1} parent=11 // pred_fallthru
          _
      $region12: #{tpu_custom_call.1} parent=5 // pred_fallthru
        _
      %p577 = scmp.lt.s32.totalorder %s32, 4
      // Predicated region
      $region33: #{tpu_custom_call.1} parent=5 // pred_check
        %p578 = pneg %p577
      $region34: #{tpu_custom_call.1} parent=5 // pred_check_branch
        %580 = sbr.rel (%p578) target = $region36
      $region35: #{tpu_custom_call.1} parent=5 // pred_region
        // Predicated region
        $region37: #{tpu_custom_call.1} parent=35 // pred_check
          %p581 = pneg %p64
        $region38: #{tpu_custom_call.1} parent=35 // pred_check_branch
          %583 = sbr.rel (%p581) target = $region40
        $region39: #{tpu_custom_call.1} parent=35 // pred_region
          %s584 = sand.u32 %s32, 1
          %s585 = scalar_lea.sflag [#allocation4], %s584
          %s586 = sand.u32 %s54, 1
          %s587 = scalar_lea.vmem [#allocation3], %s586
          %s589 = ssub.s32 16, 16
          %590 = vsyncadd %s585, %s589
          %s591 = smul.addr %s39, 16
          %s592 = scalar_lea.hbm %s0, %s591
          %s594 = sshll.u32 %s587, 4
          %s595 = int_to_ptr.vmem [resolvable:$true] %s594
          %597 = dma.hbm_to_vmem [thread:$0]  %s592, 16, %s595, %s585
        $region40: #{tpu_custom_call.1} parent=35 // pred_fallthru
          _
        // Predicated region
        $region41: #{tpu_custom_call.1} parent=35 // pred_check
          %p598 = pneg %p90
        $region42: #{tpu_custom_call.1} parent=35 // pred_check_branch
          %600 = sbr.rel (%p598) target = $region44
        $region43: #{tpu_custom_call.1} parent=35 // pred_region
          %p601 = scmp.lt.s32.totalorder %s39, 1
          %s602 = scalar_select %p601, %s39, 1
          %s603 = smul.addr %s602, 8
          %s604 = scalar_lea.vmem %s1, %s603
        $region44: #{tpu_custom_call.1} parent=35 // pred_fallthru
          _
        // Predicated region
        $region45: #{tpu_custom_call.1} parent=35 // pred_check
          %p605 = pneg %p158
        $region46: #{tpu_custom_call.1} parent=35 // pred_check_branch
          %607 = sbr.rel (%p605) target = $region48
        $region47: #{tpu_custom_call.1} parent=35 // pred_region
          %p608 = scmp.lt.s32.totalorder %s40, 1
          %s609 = scalar_select %p608, %s40, 1
          %s610 = smul.addr %s609, 4
          %s611 = smul.addr %s610, 4
          %s612 = scalar_lea.vmem %s4, %s611
        $region48: #{tpu_custom_call.1} parent=35 // pred_fallthru
          _
        // Predicated region
        $region49: #{tpu_custom_call.1} parent=35 // pred_check
          %p613 = pneg %p184
        $region50: #{tpu_custom_call.1} parent=35 // pred_check_branch
          %615 = sbr.rel (%p613) target = $region52
        $region51: #{tpu_custom_call.1} parent=35 // pred_region
          %s616 = sand.u32 %s32, 1
          %s617 = scalar_lea.sflag [#allocation4], %s616
          %s618 = sand.u32 %s174, 1
          %s619 = scalar_lea.vmem [#allocation8], %s618
          %s621 = ssub.s32 16, 16
          %622 = vsyncadd %s617, %s621
          %s623 = smul.addr %s40, 16
          %s624 = scalar_lea.hbm %s5, %s623
          %s626 = sshll.u32 %s619, 4
          %s627 = int_to_ptr.vmem [resolvable:$true] %s626
          %629 = dma.hbm_to_vmem [thread:$0]  %s624, 16, %s627, %s617
        $region52: #{tpu_custom_call.1} parent=35 // pred_fallthru
          _
        // Predicated region
        $region53: #{tpu_custom_call.1} parent=35 // pred_check
          %p630 = pneg %p210
        $region54: #{tpu_custom_call.1} parent=35 // pred_check_branch
          %632 = sbr.rel (%p630) target = $region56
        $region55: #{tpu_custom_call.1} parent=35 // pred_region
          %p633 = scmp.lt.s32.totalorder %s40, 1
          %s634 = scalar_select %p633, %s40, 1
          %s635 = smul.addr %s634, 4
          %s636 = smul.addr %s635, 4
          %s637 = scalar_lea.vmem %s6, %s636
        $region56: #{tpu_custom_call.1} parent=35 // pred_fallthru
          _
        // Predicated region
        $region57: #{tpu_custom_call.1} parent=35 // pred_check
          %p638 = pneg %p236
        $region58: #{tpu_custom_call.1} parent=35 // pred_check_branch
          %640 = sbr.rel (%p638) target = $region60
        $region59: #{tpu_custom_call.1} parent=35 // pred_region
          %s641 = sand.u32 %s32, 1
          %s642 = scalar_lea.sflag [#allocation4], %s641
          %s643 = sand.u32 %s226, 1
          %s644 = scalar_lea.vmem [#allocation9], %s643
          %s646 = ssub.s32 16, 16
          %647 = vsyncadd %s642, %s646
          %s648 = smul.addr %s40, 16
          %s649 = scalar_lea.hbm %s7, %s648
          %s651 = sshll.u32 %s644, 4
          %s652 = int_to_ptr.vmem [resolvable:$true] %s651
          %654 = dma.hbm_to_vmem [thread:$0]  %s649, 16, %s652, %s642
        $region60: #{tpu_custom_call.1} parent=35 // pred_fallthru
          _
        // Predicated region
        $region61: #{tpu_custom_call.1} parent=35 // pred_check
          %p655 = pneg %p262
        $region62: #{tpu_custom_call.1} parent=35 // pred_check_branch
          %657 = sbr.rel (%p655) target = $region64
        $region63: #{tpu_custom_call.1} parent=35 // pred_region
          %s658 = sand.u32 %s32, 1
          %s659 = scalar_lea.sflag [#allocation4], %s658
          %s660 = sand.u32 %s252, 1
          %s661 = scalar_lea.vmem [#allocation10], %s660
          %s663 = ssub.s32 16, 16
          %664 = vsyncadd %s659, %s663
          %s665 = smul.addr %s40, 16
          %s666 = scalar_lea.hbm %s8, %s665
          %s668 = sshll.u32 %s661, 4
          %s669 = int_to_ptr.vmem [resolvable:$true] %s668
          %671 = dma.hbm_to_vmem [thread:$0]  %s666, 16, %s669, %s659
        $region64: #{tpu_custom_call.1} parent=35 // pred_fallthru
          _
        // Predicated region
        $region65: #{tpu_custom_call.1} parent=35 // pred_check
          %p672 = pneg %p288
        $region66: #{tpu_custom_call.1} parent=35 // pred_check_branch
          %674 = sbr.rel (%p672) target = $region68
        $region67: #{tpu_custom_call.1} parent=35 // pred_region
          %s675 = sand.u32 %s32, 1
          %s676 = scalar_lea.sflag [#allocation4], %s675
          %s677 = sand.u32 %s278, 1
          %s678 = scalar_lea.vmem [#allocation11], %s677
          %s680 = ssub.s32 16, 16
          %681 = vsyncadd %s676, %s680
          %s682 = smul.addr %s40, 16
          %s683 = scalar_lea.hbm %s9, %s682
          %s685 = sshll.u32 %s678, 4
          %s686 = int_to_ptr.vmem [resolvable:$true] %s685
          %688 = dma.hbm_to_vmem [thread:$0]  %s683, 16, %s686, %s676
        $region68: #{tpu_custom_call.1} parent=35 // pred_fallthru
          _
        // Predicated region
        $region69: #{tpu_custom_call.1} parent=35 // pred_check
          %p689 = pneg %p314
        $region70: #{tpu_custom_call.1} parent=35 // pred_check_branch
          %691 = sbr.rel (%p689) target = $region72
        $region71: #{tpu_custom_call.1} parent=35 // pred_region
          %p692 = scmp.lt.s32.totalorder %s40, 1
          %s693 = scalar_select %p692, %s40, 1
          %s694 = smul.addr %s693, 4
          %s695 = smul.addr %s694, 4
          %s696 = scalar_lea.vmem %s10, %s695
        $region72: #{tpu_custom_call.1} parent=35 // pred_fallthru
          _
        // Predicated region
        $region73: #{tpu_custom_call.1} parent=35 // pred_check
          %p697 = pneg %p340
        $region74: #{tpu_custom_call.1} parent=35 // pred_check_branch
          %699 = sbr.rel (%p697) target = $region76
        $region75: #{tpu_custom_call.1} parent=35 // pred_region
          %s700 = sand.u32 %s32, 1
          %s701 = scalar_lea.sflag [#allocation4], %s700
          %s702 = sand.u32 %s330, 1
          %s703 = scalar_lea.vmem [#allocation12], %s702
          %s705 = ssub.s32 16, 16
          %706 = vsyncadd %s701, %s705
          %s707 = smul.addr %s40, 16
          %s708 = scalar_lea.hbm %s11, %s707
          %s710 = sshll.u32 %s703, 4
          %s711 = int_to_ptr.vmem [resolvable:$true] %s710
          %713 = dma.hbm_to_vmem [thread:$0]  %s708, 16, %s711, %s701
        $region76: #{tpu_custom_call.1} parent=35 // pred_fallthru
          _
        // Predicated region
        $region77: #{tpu_custom_call.1} parent=35 // pred_check
          %p714 = pneg %p366
        $region78: #{tpu_custom_call.1} parent=35 // pred_check_branch
          %716 = sbr.rel (%p714) target = $region80
        $region79: #{tpu_custom_call.1} parent=35 // pred_region
          %p717 = scmp.lt.s32.totalorder %s40, 1
          %s718 = scalar_select %p717, %s40, 1
          %s719 = smul.addr %s718, 8
          %s720 = smul.addr %s719, 4
          %s721 = scalar_lea.vmem %s12, %s720
        $region80: #{tpu_custom_call.1} parent=35 // pred_fallthru
          _
        // Predicated region
        $region81: #{tpu_custom_call.1} parent=35 // pred_check
          %p722 = pneg %p392
        $region82: #{tpu_custom_call.1} parent=35 // pred_check_branch
          %724 = sbr.rel (%p722) target = $region84
        $region83: #{tpu_custom_call.1} parent=35 // pred_region
          %s725 = sand.u32 %s32, 1
          %s726 = scalar_lea.sflag [#allocation4], %s725
          %s727 = sand.u32 %s382, 1
          %s728 = scalar_lea.vmem [#allocation13], %s727
          %s730 = ssub.s32 16, 16
          %731 = vsyncadd %s726, %s730
          %s732 = smul.addr %s40, 16
          %s733 = scalar_lea.hbm %s13, %s732
          %s735 = sshll.u32 %s728, 4
          %s736 = int_to_ptr.vmem [resolvable:$true] %s735
          %738 = dma.hbm_to_vmem [thread:$0]  %s733, 16, %s736, %s726
        $region84: #{tpu_custom_call.1} parent=35 // pred_fallthru
          _
        // Predicated region
        $region85: #{tpu_custom_call.1} parent=35 // pred_check
          %p739 = pneg %p418
        $region86: #{tpu_custom_call.1} parent=35 // pred_check_branch
          %741 = sbr.rel (%p739) target = $region88
        $region87: #{tpu_custom_call.1} parent=35 // pred_region
          %p742 = scmp.lt.s32.totalorder %s40, 1
          %s743 = scalar_select %p742, %s40, 1
          %s744 = scalar_lea.vmem %s14, %s743
        $region88: #{tpu_custom_call.1} parent=35 // pred_fallthru
          _
        // Predicated region
        $region89: #{tpu_custom_call.1} parent=35 // pred_check
          %p745 = pneg %p444
        $region90: #{tpu_custom_call.1} parent=35 // pred_check_branch
          %747 = sbr.rel (%p745) target = $region92
        $region91: #{tpu_custom_call.1} parent=35 // pred_region
          %p748 = scmp.lt.s32.totalorder %s40, 1
          %s749 = scalar_select %p748, %s40, 1
          %s750 = scalar_lea.vmem %s15, %s749
        $region92: #{tpu_custom_call.1} parent=35 // pred_fallthru
          _
      $region36: #{tpu_custom_call.1} parent=5 // pred_fallthru
        _
      %p751 = scmp.le.s32.totalorder 1, %s32
      %p752 = scmp.lt.s32.totalorder %s32, 5
      %p753 = pnand %p751, %p752
      %p754 = pneg %p753
      // Predicated region
      $region93: #{tpu_custom_call.1} parent=5 // pred_check
        _
      $region94: #{tpu_custom_call.1} parent=5 // pred_check_branch
        %756 = sbr.rel (%p753) target = $region96
      $region95: #{tpu_custom_call.1} parent=5 // pred_region
        %s757 = ssub.s32 %s32, 1
        %s758 = sand.u32 %s37, 1
        %s759 = scalar_lea.sflag [#allocation4], %s758
        %s760 = sand.u32 %s57, 1
        %s761 = scalar_lea.vmem [#allocation3], %s760
        // Predicated region
        $region97: #{tpu_custom_call.1} parent=95 // pred_check
          %p762 = pneg %p70
        $region98: #{tpu_custom_call.1} parent=95 // pred_check_branch
          %764 = sbr.rel (%p762) target = $region100
        $region99: #{tpu_custom_call.1} parent=95 // pred_region
          %765 = dma.done %s759, 16
        $region100: #{tpu_custom_call.1} parent=95 // pred_fallthru
          _
        // Predicated region
        $region101: #{tpu_custom_call.1} parent=95 // pred_check
          %p766 = pneg %p138
        $region102: #{tpu_custom_call.1} parent=95 // pred_check_branch
          %768 = sbr.rel (%p766) target = $region104
        $region103: #{tpu_custom_call.1} parent=95 // pred_region
          %769 = dma.done [#allocation7], 16
        $region104: #{tpu_custom_call.1} parent=95 // pred_fallthru
          _
        %s770 = sand.u32 %s37, 1
        %s771 = scalar_lea.sflag [#allocation4], %s770
        %s772 = sand.u32 %s177, 1
        %s773 = scalar_lea.vmem [#allocation8], %s772
        // Predicated region
        $region105: #{tpu_custom_call.1} parent=95 // pred_check
          %p774 = pneg %p190
        $region106: #{tpu_custom_call.1} parent=95 // pred_check_branch
          %776 = sbr.rel (%p774) target = $region108
        $region107: #{tpu_custom_call.1} parent=95 // pred_region
          %777 = dma.done %s771, 16
        $region108: #{tpu_custom_call.1} parent=95 // pred_fallthru
          _
        %s778 = sand.u32 %s37, 1
        %s779 = scalar_lea.sflag [#allocation4], %s778
        %s780 = sand.u32 %s229, 1
        %s781 = scalar_lea.vmem [#allocation9], %s780
        // Predicated region
        $region109: #{tpu_custom_call.1} parent=95 // pred_check
          %p782 = pneg %p242
        $region110: #{tpu_custom_call.1} parent=95 // pred_check_branch
          %784 = sbr.rel (%p782) target = $region112
        $region111: #{tpu_custom_call.1} parent=95 // pred_region
          %785 = dma.done %s779, 16
        $region112: #{tpu_custom_call.1} parent=95 // pred_fallthru
          _
        %s786 = sand.u32 %s37, 1
        %s787 = scalar_lea.sflag [#allocation4], %s786
        %s788 = sand.u32 %s255, 1
        %s789 = scalar_lea.vmem [#allocation10], %s788
        // Predicated region
        $region113: #{tpu_custom_call.1} parent=95 // pred_check
          %p790 = pneg %p268
        $region114: #{tpu_custom_call.1} parent=95 // pred_check_branch
          %792 = sbr.rel (%p790) target = $region116
        $region115: #{tpu_custom_call.1} parent=95 // pred_region
          %793 = dma.done %s787, 16
        $region116: #{tpu_custom_call.1} parent=95 // pred_fallthru
          _
        %s794 = sand.u32 %s37, 1
        %s795 = scalar_lea.sflag [#allocation4], %s794
        %s796 = sand.u32 %s281, 1
        %s797 = scalar_lea.vmem [#allocation11], %s796
        // Predicated region
        $region117: #{tpu_custom_call.1} parent=95 // pred_check
          %p798 = pneg %p294
        $region118: #{tpu_custom_call.1} parent=95 // pred_check_branch
          %800 = sbr.rel (%p798) target = $region120
        $region119: #{tpu_custom_call.1} parent=95 // pred_region
          %801 = dma.done %s795, 16
        $region120: #{tpu_custom_call.1} parent=95 // pred_fallthru
          _
        %s802 = sand.u32 %s37, 1
        %s803 = scalar_lea.sflag [#allocation4], %s802
        %s804 = sand.u32 %s333, 1
        %s805 = scalar_lea.vmem [#allocation12], %s804
        // Predicated region
        $region121: #{tpu_custom_call.1} parent=95 // pred_check
          %p806 = pneg %p346
        $region122: #{tpu_custom_call.1} parent=95 // pred_check_branch
          %808 = sbr.rel (%p806) target = $region124
        $region123: #{tpu_custom_call.1} parent=95 // pred_region
          %809 = dma.done %s803, 16
        $region124: #{tpu_custom_call.1} parent=95 // pred_fallthru
          _
        %s810 = sand.u32 %s37, 1
        %s811 = scalar_lea.sflag [#allocation4], %s810
        %s812 = sand.u32 %s385, 1
        %s813 = scalar_lea.vmem [#allocation13], %s812
        // Predicated region
        $region125: #{tpu_custom_call.1} parent=95 // pred_check
          %p814 = pneg %p398
        $region126: #{tpu_custom_call.1} parent=95 // pred_check_branch
          %816 = sbr.rel (%p814) target = $region128
        $region127: #{tpu_custom_call.1} parent=95 // pred_region
          %817 = dma.done %s811, 16
        $region128: #{tpu_custom_call.1} parent=95 // pred_fallthru
          _
        %s818 = sand.u32 %s37, 1
        %s819 = scalar_lea.sflag [#allocation4], %s818
        %s820 = sand.u32 %s57, 1
        %s821 = scalar_lea.vmem [#allocation3], %s820
        %p822 = pneg %p70
        %p823 = pneg %p67
        %p824 = scmp.lt.s32.totalorder %s41, 1
        %s825 = scalar_select %p824, %s41, 1
        %s826 = smul.addr %s825, 8
        %s827 = scalar_lea.vmem %s1, %s826
        %p828 = pneg %p96
        %p829 = pneg %p93
        %p830 = pneg %p117
        %p831 = pneg %p114
        %p832 = pneg %p138
        %p833 = pneg %p135
        %p834 = scmp.lt.s32.totalorder %s42, 1
        %s835 = scalar_select %p834, %s42, 1
        %s836 = smul.addr %s835, 4
        %s837 = smul.addr %s836, 4
        %s838 = scalar_lea.vmem %s4, %s837
        %p839 = pneg %p164
        %p840 = pneg %p161
        %s841 = sand.u32 %s37, 1
        %s842 = scalar_lea.sflag [#allocation4], %s841
        %s843 = sand.u32 %s177, 1
        %s844 = scalar_lea.vmem [#allocation8], %s843
        %p845 = pneg %p190
        %p846 = pneg %p187
        %p847 = scmp.lt.s32.totalorder %s42, 1
        %s848 = scalar_select %p847, %s42, 1
        %s849 = smul.addr %s848, 4
        %s850 = smul.addr %s849, 4
        %s851 = scalar_lea.vmem %s6, %s850
        %p852 = pneg %p216
        %p853 = pneg %p213
        %s854 = sand.u32 %s37, 1
        %s855 = scalar_lea.sflag [#allocation4], %s854
        %s856 = sand.u32 %s229, 1
        %s857 = scalar_lea.vmem [#allocation9], %s856
        %p858 = pneg %p242
        %p859 = pneg %p239
        %s860 = sand.u32 %s37, 1
        %s861 = scalar_lea.sflag [#allocation4], %s860
        %s862 = sand.u32 %s255, 1
        %s863 = scalar_lea.vmem [#allocation10], %s862
        %p864 = pneg %p268
        %p865 = pneg %p265
        %s866 = sand.u32 %s37, 1
        %s867 = scalar_lea.sflag [#allocation4], %s866
        %s868 = sand.u32 %s281, 1
        %s869 = scalar_lea.vmem [#allocation11], %s868
        %p870 = pneg %p294
        %p871 = pneg %p291
        %p872 = scmp.lt.s32.totalorder %s42, 1
        %s873 = scalar_select %p872, %s42, 1
        %s874 = smul.addr %s873, 4
        %s875 = smul.addr %s874, 4
        %s876 = scalar_lea.vmem %s10, %s875
        %p877 = pneg %p320
        %p878 = pneg %p317
        %s879 = sand.u32 %s37, 1
        %s880 = scalar_lea.sflag [#allocation4], %s879
        %s881 = sand.u32 %s333, 1
        %s882 = scalar_lea.vmem [#allocation12], %s881
        %p883 = pneg %p346
        %p884 = pneg %p343
        %p885 = scmp.lt.s32.totalorder %s42, 1
        %s886 = scalar_select %p885, %s42, 1
        %s887 = smul.addr %s886, 8
        %s888 = smul.addr %s887, 4
        %s889 = scalar_lea.vmem %s12, %s888
        %p890 = pneg %p372
        %p891 = pneg %p369
        %s892 = sand.u32 %s37, 1
        %s893 = scalar_lea.sflag [#allocation4], %s892
        %s894 = sand.u32 %s385, 1
        %s895 = scalar_lea.vmem [#allocation13], %s894
        %p896 = pneg %p398
        %p897 = pneg %p395
        %p898 = scmp.lt.s32.totalorder %s42, 1
        %s899 = scalar_select %p898, %s42, 1
        %s900 = scalar_lea.vmem %s14, %s899
        %p901 = pneg %p424
        %p902 = pneg %p421
        %p903 = scmp.lt.s32.totalorder %s42, 1
        %s904 = scalar_select %p903, %s42, 1
        %s905 = scalar_lea.vmem %s15, %s904
        %p906 = pneg %p450
        %p907 = pneg %p447
        %p908 = pneg %p471
        %p909 = pneg %p468
        %p910 = pneg %p492
        %p911 = pneg %p489
        %p912 = pneg %p513
        %p913 = pneg %p510
        %p914 = pneg %p539
        %p915 = pneg %p536
        %s916 = sand.u32 %s526, 1
        %s917 = scalar_lea.sflag [#allocation5], %s916
        %s918 = sand.u32 %s526, 1
        %s919 = scalar_lea.vmem [#allocation14], %s918
        %p920 = scmp.lt.s32.totalorder %s41, 1
        %s921 = scalar_select %p920, %s41, 1
        %s922 = smul.addr %s921, 8
        %s923 = scalar_lea.vmem %s1, %s922
        %p924 = scmp.lt.s32.totalorder %s42, 1
        %s925 = scalar_select %p924, %s42, 1
        %s926 = smul.addr %s925, 4
        %s927 = smul.addr %s926, 4
        %s928 = scalar_lea.vmem %s4, %s927
        %p929 = scmp.lt.s32.totalorder %s42, 1
        %s930 = scalar_select %p929, %s42, 1
        %s931 = smul.addr %s930, 4
        %s932 = smul.addr %s931, 4
        %s933 = scalar_lea.vmem %s6, %s932
        %p934 = scmp.lt.s32.totalorder %s42, 1
        %s935 = scalar_select %p934, %s42, 1
        %s936 = smul.addr %s935, 4
        %s937 = smul.addr %s936, 4
        %s938 = scalar_lea.vmem %s10, %s937
        %p939 = scmp.lt.s32.totalorder %s42, 1
        %s940 = scalar_select %p939, %s42, 1
        %s941 = smul.addr %s940, 8
        %s942 = smul.addr %s941, 4
        %s943 = scalar_lea.vmem %s12, %s942
        %p944 = scmp.lt.s32.totalorder %s42, 1
        %s945 = scalar_select %p944, %s42, 1
        %s946 = scalar_lea.vmem %s14, %s945
        %p947 = scmp.lt.s32.totalorder %s42, 1
        %s948 = scalar_select %p947, %s42, 1
        %s949 = scalar_lea.vmem %s15, %s948
        %p951 = scmp.eq.s32.totalorder %s42, 0
        // Predicated region
        $region129: #{tpu_custom_call.1} parent=95 // pred_check
          %p952 = pneg %p951
        $region130: #{tpu_custom_call.1} parent=95 // pred_check_branch
          %954 = sbr.rel (%p952) target = $region132
        $region131: #{tpu_custom_call.1} parent=95 // pred_region
          %v955 = vld [vmem:[%s923] sm:$0xff]
          %v956 = vld [vmem:[%s2] sm:$0x1]
          %v957 = vld [vmem:[#allocation6] sm:$0x1]
          %vm958 = vcmask 261120
          %v959 = vsel %vm958, %v955, 0.0
          %960 = vadd.xlane.f32.xlu0 %v959
          %v961 = vpop.xlane.xlu0 %960
          %v962 = vrcp.pop 32.0
          %v963 = vmul.f32 %v961, %v962
          %v964 = vsub.f32 %v955, %v963
          %v965 = vmul.f32 %v964, %v964
          %v966 = vsel %vm958, %v965, 0.0
          %967 = vadd.xlane.f32.xlu0 %v966
          %v968 = vpop.xlane.xlu0 %967
          %v969 = vmul.f32 %v968, %v962
          %v970 = vadd.f32 %v969, 1e-05
          %v971 = vrsqrt.pop %v970
          %v972 = vmul.f32 %v964, %v971
          %v974 = vlaneseq
          %v975 = vshrl.u32 %v974, 7
          %v976 = vsub.s32 0, %v975
          %v977 = vrot.slane %v956, %v976
          %v979 = vmul.f32 %v972, %v977
          %v981 = vlaneseq
          %v982 = vshrl.u32 %v981, 7
          %v983 = vsub.s32 0, %v982
          %v984 = vrot.slane %v957, %v983
          %v986 = vadd.f32 %v979, %v984
          %987 = vst.msk [vmem:[#allocation2] sm:$0xff] %vm958, %v986
        $region132: #{tpu_custom_call.1} parent=95 // pred_fallthru
          _
        %v988 = vld [vmem:[#allocation2] sm:$0xff]
        %v989 = vpack.c.bf16 %v988, %v988
        %v990 = vld [vmem:[%s928] sm:$0xf]
        %v991 = vld [vmem:[%s928 + $0x4] sm:$0xf]
        %v992 = vld [vmem:[%s928 + $0x8] sm:$0xf]
        %v993 = vld [vmem:[%s928 + $0xc] sm:$0xf]
        %v994 = vld [vmem:[%s773] sm:$0x1]
        %v996 = vlaneseq
        %v997 = vshrl.u32 %v996, 7
        %v998 = vsub.s32 0, %v997
        %v999 = vrot.slane %v994, %v998
        %v1005 = vunpack.c.l.b16 %v990
        %v1006 = vunpack.c.l.b16 %v991
        %v1007 = vunpack.c.l.b16 %v992
        %v1008 = vunpack.c.l.b16 %v993
        %v1009 = vpack.c.b16 %v1006, %v1005
        %v1010 = vpack.c.b16 %v1008, %v1007
        %vm1013 = vcmask 261120
        %v1015 = vsel %vm1013, %v989, 0
        %1017 = vmatprep.subr.bf16.mxu0 0
        %1018 = vmatpush1.bf16.msra.mxu0 %v1009
        %1019 = vmatprep.subr.bf16.mxu0 0
        %1020 = vmatpush1.bf16.msra.mxu0 %v1010
        %1021 = vmatprep.subr.bf16.mxu0 0
        %1022 = vmatpush1.bf16.msra.mxu0 0
        %1023 = vmatprep.subr.bf16.mxu0 0
        %1024 = vmatpush1.bf16.msra.mxu0 0
        %1025 = vmatprep.subr.bf16.mxu0 0
        %1026 = vmatpush1.bf16.msra.mxu0 0
        %1027 = vmatprep.subr.bf16.mxu0 0
        %1028 = vmatpush1.bf16.msra.mxu0 0
        %1029 = vmatprep.subr.bf16.mxu0 0
        %1030 = vmatpush1.bf16.msra.mxu0 0
        %1031 = vmatprep.subr.bf16.mxu0 0
        %1032 = vmatpush1.bf16.msra.mxu0 0
        %1033 = vmatprep.subr.bf16.mxu0 0
        %1034 = vmatpush1.bf16.msra.mxu0 0
        %1035 = vmatprep.subr.bf16.mxu0 0
        %1036 = vmatpush1.bf16.msra.mxu0 0
        %1037 = vmatprep.subr.bf16.mxu0 0
        %1038 = vmatpush1.bf16.msra.mxu0 0
        %1039 = vmatprep.subr.bf16.mxu0 0
        %1040 = vmatpush1.bf16.msra.mxu0 0
        %1041 = vmatprep.subr.bf16.mxu0 0
        %1042 = vmatpush1.bf16.msra.mxu0 0
        %1043 = vmatprep.subr.bf16.mxu0 0
        %1044 = vmatpush1.bf16.msra.mxu0 0
        %1045 = vmatprep.subr.bf16.mxu0 0
        %1046 = vmatpush1.bf16.msra.mxu0 0
        %1047 = vmatprep.subr.bf16.mxu0 0
        %1048 = vmatpush1.bf16.msra.mxu0 0
        %1049 = vmatprep.mubr.bf16.mxu0 0
        %1050 = vmatmul.mubr.bf16.gmra.mrb[0].mxu0 %v1015
        %v1051 = vpop.f32.mrb[0].mxu0
        %v1052 = vadd.f32 %v999, %v1051
        %v1053 = vpop.f32.mrb[0].mxu0
        %v1054 = vpop.f32.mrb[0].mxu0
        %v1055 = vpop.f32.mrb[0].mxu0
        %1056 = vdwg.mxu0
        %1058 = vrot.lane.b32.xlu0 %v1052, 120
        %v1059 = vpop.permute.xlu0 %1058
        %1061 = vrot.lane.b32.xlu0 %v1052, 112
        %v1062 = vpop.permute.xlu0 %1061
        %1064 = vrot.lane.b32.xlu0 %v1052, 104
        %v1065 = vpop.permute.xlu0 %1064
        %v1067 = vmul.f32 %v1052, 0.35355338
        %v1068 = vmul.f32 %v1059, 0.35355338
        %v1069 = vmul.f32 %v1062, 0.35355338
        %v1070 = vmul.f32 %v1065, 0.35355338
        %v1071 = vpack.c.bf16 %v1067, %v1067
        %v1072 = vpack.c.bf16 %v1068, %v1068
        %v1073 = vpack.c.bf16 %v1069, %v1069
        %v1074 = vpack.c.bf16 %v1070, %v1070
        %v1075 = vpack.c.bf16 %v1052, %v1052
        %v1076 = vpack.c.bf16 %v1059, %v1059
        %v1077 = vpack.c.bf16 %v1062, %v1062
        %v1078 = vpack.c.bf16 %v1065, %v1065
        %v1079 = vld [vmem:[%s761] sm:$0x1]
        %v1081 = vlaneseq
        %v1082 = vshrl.u32 %v1081, 7
        %v1083 = vsub.s32 0, %v1082
        %v1084 = vrot.slane %v1079, %v1083
        %1087 = vrot.lane.b32.xlu0 %v1075, 96
        %v1088 = vpop.permute.xlu0 %1087
        %vm1089 = vcmask 64512
        %v1091 = vsel %vm1089, %v1071, 0
        %v1094 = vsel %vm1089, %v1088, 0
        %1096 = vmatprep.subr.bf16.mxu0 0
        %1097 = vmatpush1.bf16.xpose.msra.mxu0 %v1094
        %1098 = vmatprep.subr.bf16.mxu0 0
        %1099 = vmatpush1.bf16.xpose.msra.mxu0 0
        %1100 = vmatprep.subr.bf16.mxu0 0
        %1101 = vmatpush1.bf16.xpose.msra.mxu0 0
        %1102 = vmatprep.subr.bf16.mxu0 0
        %1103 = vmatpush1.bf16.xpose.msra.mxu0 0
        %1104 = vmatprep.subr.bf16.mxu0 0
        %1105 = vmatpush1.bf16.xpose.msra.mxu0 0
        %1106 = vmatprep.subr.bf16.mxu0 0
        %1107 = vmatpush1.bf16.xpose.msra.mxu0 0
        %1108 = vmatprep.subr.bf16.mxu0 0
        %1109 = vmatpush1.bf16.xpose.msra.mxu0 0
        %1110 = vmatprep.subr.bf16.mxu0 0
        %1111 = vmatpush1.bf16.xpose.msra.mxu0 0
        %1112 = vmatprep.subr.bf16.mxu0 0
        %1113 = vmatpush1.bf16.xpose.msra.mxu0 0
        %1114 = vmatprep.subr.bf16.mxu0 0
        %1115 = vmatpush1.bf16.xpose.msra.mxu0 0
        %1116 = vmatprep.subr.bf16.mxu0 0
        %1117 = vmatpush1.bf16.xpose.msra.mxu0 0
        %1118 = vmatprep.subr.bf16.mxu0 0
        %1119 = vmatpush1.bf16.xpose.msra.mxu0 0
        %1120 = vmatprep.subr.bf16.mxu0 0
        %1121 = vmatpush1.bf16.xpose.msra.mxu0 0
        %1122 = vmatprep.subr.bf16.mxu0 0
        %1123 = vmatpush1.bf16.xpose.msra.mxu0 0
        %1124 = vmatprep.subr.bf16.mxu0 0
        %1125 = vmatpush1.bf16.xpose.msra.mxu0 0
        %1126 = vmatprep.subr.bf16.mxu0 0
        %1127 = vmatpush1.bf16.xpose.msra.mxu0 0
        %1128 = vmatprep.mubr.bf16.mxu0 0
        %1129 = vmatmul.mubr.bf16.gmra.mrb[0].mxu0 %v1091
        %v1130 = vpop.f32.mrb[0].mxu0
        %v1131 = vadd.f32 %v1084, %v1130
        %v1132 = vpop.f32.mrb[0].mxu0
        %v1133 = vpop.f32.mrb[0].mxu0
        %v1134 = vpop.f32.mrb[0].mxu0
        %1135 = vdwg.mxu0
        %1137 = vrot.lane.b32.xlu0 %v1076, 96
        %v1138 = vpop.permute.xlu0 %1137
        %v1140 = vsel %vm1089, %v1072, 0
        %v1143 = vsel %vm1089, %v1138, 0
        %1145 = vmatprep.subr.bf16.mxu0 0
        %1146 = vmatpush1.bf16.xpose.msra.mxu0 %v1143
        %1147 = vmatprep.subr.bf16.mxu0 0
        %1148 = vmatpush1.bf16.xpose.msra.mxu0 0
        %1149 = vmatprep.subr.bf16.mxu0 0
        %1150 = vmatpush1.bf16.xpose.msra.mxu0 0
        %1151 = vmatprep.subr.bf16.mxu0 0
        %1152 = vmatpush1.bf16.xpose.msra.mxu0 0
        %1153 = vmatprep.subr.bf16.mxu0 0
        %1154 = vmatpush1.bf16.xpose.msra.mxu0 0
        %1155 = vmatprep.subr.bf16.mxu0 0
        %1156 = vmatpush1.bf16.xpose.msra.mxu0 0
        %1157 = vmatprep.subr.bf16.mxu0 0
        %1158 = vmatpush1.bf16.xpose.msra.mxu0 0
        %1159 = vmatprep.subr.bf16.mxu0 0
        %1160 = vmatpush1.bf16.xpose.msra.mxu0 0
        %1161 = vmatprep.subr.bf16.mxu0 0
        %1162 = vmatpush1.bf16.xpose.msra.mxu0 0
        %1163 = vmatprep.subr.bf16.mxu0 0
        %1164 = vmatpush1.bf16.xpose.msra.mxu0 0
        %1165 = vmatprep.subr.bf16.mxu0 0
        %1166 = vmatpush1.bf16.xpose.msra.mxu0 0
        %1167 = vmatprep.subr.bf16.mxu0 0
        %1168 = vmatpush1.bf16.xpose.msra.mxu0 0
        %1169 = vmatprep.subr.bf16.mxu0 0
        %1170 = vmatpush1.bf16.xpose.msra.mxu0 0
        %1171 = vmatprep.subr.bf16.mxu0 0
        %1172 = vmatpush1.bf16.xpose.msra.mxu0 0
        %1173 = vmatprep.subr.bf16.mxu0 0
        %1174 = vmatpush1.bf16.xpose.msra.mxu0 0
        %1175 = vmatprep.subr.bf16.mxu0 0
        %1176 = vmatpush1.bf16.xpose.msra.mxu0 0
        %1177 = vmatprep.mubr.bf16.mxu0 0
        %1178 = vmatmul.mubr.bf16.gmra.mrb[0].mxu0 %v1140
        %v1179 = vpop.f32.mrb[0].mxu0
        %v1180 = vadd.f32 %v1084, %v1179
        %v1181 = vpop.f32.mrb[0].mxu0
        %v1182 = vpop.f32.mrb[0].mxu0
        %v1183 = vpop.f32.mrb[0].mxu0
        %1184 = vdwg.mxu0
        %1186 = vrot.lane.b32.xlu0 %v1077, 96
        %v1187 = vpop.permute.xlu0 %1186
        %v1189 = vsel %vm1089, %v1073, 0
        %v1192 = vsel %vm1089, %v1187, 0
        %1194 = vmatprep.subr.bf16.mxu0 0
        %1195 = vmatpush1.bf16.xpose.msra.mxu0 %v1192
        %1196 = vmatprep.subr.bf16.mxu0 0
        %1197 = vmatpush1.bf16.xpose.msra.mxu0 0
        %1198 = vmatprep.subr.bf16.mxu0 0
        %1199 = vmatpush1.bf16.xpose.msra.mxu0 0
        %1200 = vmatprep.subr.bf16.mxu0 0
        %1201 = vmatpush1.bf16.xpose.msra.mxu0 0
        %1202 = vmatprep.subr.bf16.mxu0 0
        %1203 = vmatpush1.bf16.xpose.msra.mxu0 0
        %1204 = vmatprep.subr.bf16.mxu0 0
        %1205 = vmatpush1.bf16.xpose.msra.mxu0 0
        %1206 = vmatprep.subr.bf16.mxu0 0
        %1207 = vmatpush1.bf16.xpose.msra.mxu0 0
        %1208 = vmatprep.subr.bf16.mxu0 0
        %1209 = vmatpush1.bf16.xpose.msra.mxu0 0
        %1210 = vmatprep.subr.bf16.mxu0 0
        %1211 = vmatpush1.bf16.xpose.msra.mxu0 0
        %1212 = vmatprep.subr.bf16.mxu0 0
        %1213 = vmatpush1.bf16.xpose.msra.mxu0 0
        %1214 = vmatprep.subr.bf16.mxu0 0
        %1215 = vmatpush1.bf16.xpose.msra.mxu0 0
        %1216 = vmatprep.subr.bf16.mxu0 0
        %1217 = vmatpush1.bf16.xpose.msra.mxu0 0
        %1218 = vmatprep.subr.bf16.mxu0 0
        %1219 = vmatpush1.bf16.xpose.msra.mxu0 0
        %1220 = vmatprep.subr.bf16.mxu0 0
        %1221 = vmatpush1.bf16.xpose.msra.mxu0 0
        %1222 = vmatprep.subr.bf16.mxu0 0
        %1223 = vmatpush1.bf16.xpose.msra.mxu0 0
        %1224 = vmatprep.subr.bf16.mxu0 0
        %1225 = vmatpush1.bf16.xpose.msra.mxu0 0
        %1226 = vmatprep.mubr.bf16.mxu0 0
        %1227 = vmatmul.mubr.bf16.gmra.mrb[0].mxu0 %v1189
        %v1228 = vpop.f32.mrb[0].mxu0
        %v1229 = vadd.f32 %v1084, %v1228
        %v1230 = vpop.f32.mrb[0].mxu0
        %v1231 = vpop.f32.mrb[0].mxu0
        %v1232 = vpop.f32.mrb[0].mxu0
        %1233 = vdwg.mxu0
        %1235 = vrot.lane.b32.xlu0 %v1078, 96
        %v1236 = vpop.permute.xlu0 %1235
        %v1238 = vsel %vm1089, %v1074, 0
        %v1241 = vsel %vm1089, %v1236, 0
        %1243 = vmatprep.subr.bf16.mxu0 0
        %1244 = vmatpush1.bf16.xpose.msra.mxu0 %v1241
        %1245 = vmatprep.subr.bf16.mxu0 0
        %1246 = vmatpush1.bf16.xpose.msra.mxu0 0
        %1247 = vmatprep.subr.bf16.mxu0 0
        %1248 = vmatpush1.bf16.xpose.msra.mxu0 0
        %1249 = vmatprep.subr.bf16.mxu0 0
        %1250 = vmatpush1.bf16.xpose.msra.mxu0 0
        %1251 = vmatprep.subr.bf16.mxu0 0
        %1252 = vmatpush1.bf16.xpose.msra.mxu0 0
        %1253 = vmatprep.subr.bf16.mxu0 0
        %1254 = vmatpush1.bf16.xpose.msra.mxu0 0
        %1255 = vmatprep.subr.bf16.mxu0 0
        %1256 = vmatpush1.bf16.xpose.msra.mxu0 0
        %1257 = vmatprep.subr.bf16.mxu0 0
        %1258 = vmatpush1.bf16.xpose.msra.mxu0 0
        %1259 = vmatprep.subr.bf16.mxu0 0
        %1260 = vmatpush1.bf16.xpose.msra.mxu0 0
        %1261 = vmatprep.subr.bf16.mxu0 0
        %1262 = vmatpush1.bf16.xpose.msra.mxu0 0
        %1263 = vmatprep.subr.bf16.mxu0 0
        %1264 = vmatpush1.bf16.xpose.msra.mxu0 0
        %1265 = vmatprep.subr.bf16.mxu0 0
        %1266 = vmatpush1.bf16.xpose.msra.mxu0 0
        %1267 = vmatprep.subr.bf16.mxu0 0
        %1268 = vmatpush1.bf16.xpose.msra.mxu0 0
        %1269 = vmatprep.subr.bf16.mxu0 0
        %1270 = vmatpush1.bf16.xpose.msra.mxu0 0
        %1271 = vmatprep.subr.bf16.mxu0 0
        %1272 = vmatpush1.bf16.xpose.msra.mxu0 0
        %1273 = vmatprep.subr.bf16.mxu0 0
        %1274 = vmatpush1.bf16.xpose.msra.mxu0 0
        %1275 = vmatprep.mubr.bf16.mxu0 0
        %1276 = vmatmul.mubr.bf16.gmra.mrb[0].mxu0 %v1238
        %v1277 = vpop.f32.mrb[0].mxu0
        %v1278 = vadd.f32 %v1084, %v1277
        %v1279 = vpop.f32.mrb[0].mxu0
        %v1280 = vpop.f32.mrb[0].mxu0
        %v1281 = vpop.f32.mrb[0].mxu0
        %1282 = vdwg.mxu0
        %v1283 = vsel %vm1089, %v1131, -inf
        %1284 = vmax.xlane.f32.xlu0 %v1283
        %v1285 = vpop.xlane.xlu0 %1284
        %v1286 = vsel %vm1089, %v1180, -inf
        %1287 = vmax.xlane.f32.xlu0 %v1286
        %v1288 = vpop.xlane.xlu0 %1287
        %v1289 = vsel %vm1089, %v1229, -inf
        %1290 = vmax.xlane.f32.xlu0 %v1289
        %v1291 = vpop.xlane.xlu0 %1290
        %v1292 = vsel %vm1089, %v1278, -inf
        %1293 = vmax.xlane.f32.xlu0 %v1292
        %v1294 = vpop.xlane.xlu0 %1293
        %v1295 = vsub.f32 %v1131, %v1285
        %v1296 = vsub.f32 %v1180, %v1288
        %v1297 = vsub.f32 %v1229, %v1291
        %v1298 = vsub.f32 %v1278, %v1294
        %v1299 = vmul.f32 %v1295, 1.442695
        %v1300 = vpow.pop %v1299
        %v1301 = vmul.f32 %v1296, 1.442695
        %v1302 = vpow.pop %v1301
        %v1303 = vmul.f32 %v1297, 1.442695
        %v1304 = vpow.pop %v1303
        %v1305 = vmul.f32 %v1298, 1.442695
        %v1306 = vpow.pop %v1305
        %v1307 = vsel %vm1089, %v1300, 0.0
        %1308 = vadd.xlane.f32.xlu0 %v1307
        %v1309 = vpop.xlane.xlu0 %1308
        %v1310 = vsel %vm1089, %v1302, 0.0
        %1311 = vadd.xlane.f32.xlu0 %v1310
        %v1312 = vpop.xlane.xlu0 %1311
        %v1313 = vsel %vm1089, %v1304, 0.0
        %1314 = vadd.xlane.f32.xlu0 %v1313
        %v1315 = vpop.xlane.xlu0 %1314
        %v1316 = vsel %vm1089, %v1306, 0.0
        %1317 = vadd.xlane.f32.xlu0 %v1316
        %v1318 = vpop.xlane.xlu0 %1317
        %v1319 = vrcp.pop %v1309
        %v1320 = vrcp.pop %v1312
        %v1321 = vrcp.pop %v1315
        %v1322 = vrcp.pop %v1318
        %v1323 = vmul.f32 %v1300, %v1319
        %v1324 = vmul.f32 %v1302, %v1320
        %v1325 = vmul.f32 %v1304, %v1321
        %v1326 = vmul.f32 %v1306, %v1322
        %v1327 = vpack.c.bf16 %v1323, %v1323
        %v1328 = vpack.c.bf16 %v1324, %v1324
        %v1329 = vpack.c.bf16 %v1325, %v1325
        %v1330 = vpack.c.bf16 %v1326, %v1326
        %1331 = vrot.lane.b32.xlu0 %v1075, 64
        %v1332 = vpop.permute.xlu0 %1331
        %v1334 = vsel %vm1089, %v1327, 0
        %vm1336 = vcmask 1043456
        %v1338 = vsel %vm1336, %v1332, 0
        %1340 = vmatprep.subr.bf16.mxu0 0
        %1341 = vmatpush1.bf16.msra.mxu0 %v1338
        %1342 = vmatprep.subr.bf16.mxu0 0
        %1343 = vmatpush1.bf16.msra.mxu0 0
        %1344 = vmatprep.subr.bf16.mxu0 0
        %1345 = vmatpush1.bf16.msra.mxu0 0
        %1346 = vmatprep.subr.bf16.mxu0 0
        %1347 = vmatpush1.bf16.msra.mxu0 0
        %1348 = vmatprep.subr.bf16.mxu0 0
        %1349 = vmatpush1.bf16.msra.mxu0 0
        %1350 = vmatprep.subr.bf16.mxu0 0
        %1351 = vmatpush1.bf16.msra.mxu0 0
        %1352 = vmatprep.subr.bf16.mxu0 0
        %1353 = vmatpush1.bf16.msra.mxu0 0
        %1354 = vmatprep.subr.bf16.mxu0 0
        %1355 = vmatpush1.bf16.msra.mxu0 0
        %1356 = vmatprep.subr.bf16.mxu0 0
        %1357 = vmatpush1.bf16.msra.mxu0 0
        %1358 = vmatprep.subr.bf16.mxu0 0
        %1359 = vmatpush1.bf16.msra.mxu0 0
        %1360 = vmatprep.subr.bf16.mxu0 0
        %1361 = vmatpush1.bf16.msra.mxu0 0
        %1362 = vmatprep.subr.bf16.mxu0 0
        %1363 = vmatpush1.bf16.msra.mxu0 0
        %1364 = vmatprep.subr.bf16.mxu0 0
        %1365 = vmatpush1.bf16.msra.mxu0 0
        %1366 = vmatprep.subr.bf16.mxu0 0
        %1367 = vmatpush1.bf16.msra.mxu0 0
        %1368 = vmatprep.subr.bf16.mxu0 0
        %1369 = vmatpush1.bf16.msra.mxu0 0
        %1370 = vmatprep.subr.bf16.mxu0 0
        %1371 = vmatpush1.bf16.msra.mxu0 0
        %1372 = vmatprep.mubr.bf16.mxu0 0
        %1373 = vmatmul.mubr.bf16.gmra.mrb[0].mxu0 %v1334
        %v1374 = vpop.f32.mrb[0].mxu0
        %v1375 = vadd.f32 0.0, %v1374
        %v1376 = vpop.f32.mrb[0].mxu0
        %v1377 = vpop.f32.mrb[0].mxu0
        %v1378 = vpop.f32.mrb[0].mxu0
        %1379 = vdwg.mxu0
        %1380 = vrot.lane.b32.xlu0 %v1076, 64
        %v1381 = vpop.permute.xlu0 %1380
        %v1383 = vsel %vm1089, %v1328, 0
        %v1386 = vsel %vm1336, %v1381, 0
        %1388 = vmatprep.subr.bf16.mxu0 0
        %1389 = vmatpush1.bf16.msra.mxu0 %v1386
        %1390 = vmatprep.subr.bf16.mxu0 0
        %1391 = vmatpush1.bf16.msra.mxu0 0
        %1392 = vmatprep.subr.bf16.mxu0 0
        %1393 = vmatpush1.bf16.msra.mxu0 0
        %1394 = vmatprep.subr.bf16.mxu0 0
        %1395 = vmatpush1.bf16.msra.mxu0 0
        %1396 = vmatprep.subr.bf16.mxu0 0
        %1397 = vmatpush1.bf16.msra.mxu0 0
        %1398 = vmatprep.subr.bf16.mxu0 0
        %1399 = vmatpush1.bf16.msra.mxu0 0
        %1400 = vmatprep.subr.bf16.mxu0 0
        %1401 = vmatpush1.bf16.msra.mxu0 0
        %1402 = vmatprep.subr.bf16.mxu0 0
        %1403 = vmatpush1.bf16.msra.mxu0 0
        %1404 = vmatprep.subr.bf16.mxu0 0
        %1405 = vmatpush1.bf16.msra.mxu0 0
        %1406 = vmatprep.subr.bf16.mxu0 0
        %1407 = vmatpush1.bf16.msra.mxu0 0
        %1408 = vmatprep.subr.bf16.mxu0 0
        %1409 = vmatpush1.bf16.msra.mxu0 0
        %1410 = vmatprep.subr.bf16.mxu0 0
        %1411 = vmatpush1.bf16.msra.mxu0 0
        %1412 = vmatprep.subr.bf16.mxu0 0
        %1413 = vmatpush1.bf16.msra.mxu0 0
        %1414 = vmatprep.subr.bf16.mxu0 0
        %1415 = vmatpush1.bf16.msra.mxu0 0
        %1416 = vmatprep.subr.bf16.mxu0 0
        %1417 = vmatpush1.bf16.msra.mxu0 0
        %1418 = vmatprep.subr.bf16.mxu0 0
        %1419 = vmatpush1.bf16.msra.mxu0 0
        %1420 = vmatprep.mubr.bf16.mxu0 0
        %1421 = vmatmul.mubr.bf16.gmra.mrb[0].mxu0 %v1383
        %v1422 = vpop.f32.mrb[0].mxu0
        %v1423 = vadd.f32 0.0, %v1422
        %v1424 = vpop.f32.mrb[0].mxu0
        %v1425 = vpop.f32.mrb[0].mxu0
        %v1426 = vpop.f32.mrb[0].mxu0
        %1427 = vdwg.mxu0
        %1428 = vrot.lane.b32.xlu0 %v1077, 64
        %v1429 = vpop.permute.xlu0 %1428
        %v1431 = vsel %vm1089, %v1329, 0
        %v1434 = vsel %vm1336, %v1429, 0
        %1436 = vmatprep.subr.bf16.mxu0 0
        %1437 = vmatpush1.bf16.msra.mxu0 %v1434
        %1438 = vmatprep.subr.bf16.mxu0 0
        %1439 = vmatpush1.bf16.msra.mxu0 0
        %1440 = vmatprep.subr.bf16.mxu0 0
        %1441 = vmatpush1.bf16.msra.mxu0 0
        %1442 = vmatprep.subr.bf16.mxu0 0
        %1443 = vmatpush1.bf16.msra.mxu0 0
        %1444 = vmatprep.subr.bf16.mxu0 0
        %1445 = vmatpush1.bf16.msra.mxu0 0
        %1446 = vmatprep.subr.bf16.mxu0 0
        %1447 = vmatpush1.bf16.msra.mxu0 0
        %1448 = vmatprep.subr.bf16.mxu0 0
        %1449 = vmatpush1.bf16.msra.mxu0 0
        %1450 = vmatprep.subr.bf16.mxu0 0
        %1451 = vmatpush1.bf16.msra.mxu0 0
        %1452 = vmatprep.subr.bf16.mxu0 0
        %1453 = vmatpush1.bf16.msra.mxu0 0
        %1454 = vmatprep.subr.bf16.mxu0 0
        %1455 = vmatpush1.bf16.msra.mxu0 0
        %1456 = vmatprep.subr.bf16.mxu0 0
        %1457 = vmatpush1.bf16.msra.mxu0 0
        %1458 = vmatprep.subr.bf16.mxu0 0
        %1459 = vmatpush1.bf16.msra.mxu0 0
        %1460 = vmatprep.subr.bf16.mxu0 0
        %1461 = vmatpush1.bf16.msra.mxu0 0
        %1462 = vmatprep.subr.bf16.mxu0 0
        %1463 = vmatpush1.bf16.msra.mxu0 0
        %1464 = vmatprep.subr.bf16.mxu0 0
        %1465 = vmatpush1.bf16.msra.mxu0 0
        %1466 = vmatprep.subr.bf16.mxu0 0
        %1467 = vmatpush1.bf16.msra.mxu0 0
        %1468 = vmatprep.mubr.bf16.mxu0 0
        %1469 = vmatmul.mubr.bf16.gmra.mrb[0].mxu0 %v1431
        %v1470 = vpop.f32.mrb[0].mxu0
        %v1471 = vadd.f32 0.0, %v1470
        %v1472 = vpop.f32.mrb[0].mxu0
        %v1473 = vpop.f32.mrb[0].mxu0
        %v1474 = vpop.f32.mrb[0].mxu0
        %1475 = vdwg.mxu0
        %1476 = vrot.lane.b32.xlu0 %v1078, 64
        %v1477 = vpop.permute.xlu0 %1476
        %v1479 = vsel %vm1089, %v1330, 0
        %v1482 = vsel %vm1336, %v1477, 0
        %1484 = vmatprep.subr.bf16.mxu0 0
        %1485 = vmatpush1.bf16.msra.mxu0 %v1482
        %1486 = vmatprep.subr.bf16.mxu0 0
        %1487 = vmatpush1.bf16.msra.mxu0 0
        %1488 = vmatprep.subr.bf16.mxu0 0
        %1489 = vmatpush1.bf16.msra.mxu0 0
        %1490 = vmatprep.subr.bf16.mxu0 0
        %1491 = vmatpush1.bf16.msra.mxu0 0
        %1492 = vmatprep.subr.bf16.mxu0 0
        %1493 = vmatpush1.bf16.msra.mxu0 0
        %1494 = vmatprep.subr.bf16.mxu0 0
        %1495 = vmatpush1.bf16.msra.mxu0 0
        %1496 = vmatprep.subr.bf16.mxu0 0
        %1497 = vmatpush1.bf16.msra.mxu0 0
        %1498 = vmatprep.subr.bf16.mxu0 0
        %1499 = vmatpush1.bf16.msra.mxu0 0
        %1500 = vmatprep.subr.bf16.mxu0 0
        %1501 = vmatpush1.bf16.msra.mxu0 0
        %1502 = vmatprep.subr.bf16.mxu0 0
        %1503 = vmatpush1.bf16.msra.mxu0 0
        %1504 = vmatprep.subr.bf16.mxu0 0
        %1505 = vmatpush1.bf16.msra.mxu0 0
        %1506 = vmatprep.subr.bf16.mxu0 0
        %1507 = vmatpush1.bf16.msra.mxu0 0
        %1508 = vmatprep.subr.bf16.mxu0 0
        %1509 = vmatpush1.bf16.msra.mxu0 0
        %1510 = vmatprep.subr.bf16.mxu0 0
        %1511 = vmatpush1.bf16.msra.mxu0 0
        %1512 = vmatprep.subr.bf16.mxu0 0
        %1513 = vmatpush1.bf16.msra.mxu0 0
        %1514 = vmatprep.subr.bf16.mxu0 0
        %1515 = vmatpush1.bf16.msra.mxu0 0
        %1516 = vmatprep.mubr.bf16.mxu0 0
        %1517 = vmatmul.mubr.bf16.gmra.mrb[0].mxu0 %v1479
        %v1518 = vpop.f32.mrb[0].mxu0
        %v1519 = vadd.f32 0.0, %v1518
        %v1520 = vpop.f32.mrb[0].mxu0
        %v1521 = vpop.f32.mrb[0].mxu0
        %v1522 = vpop.f32.mrb[0].mxu0
        %1523 = vdwg.mxu0
        %1525 = vrot.lane.b32.xlu0 %v1423, 8
        %v1526 = vpop.permute.xlu0 %1525
        %1529 = vrot.lane.b32.xlu0 %v1471, 16
        %v1530 = vpop.permute.xlu0 %1529
        %1533 = vrot.lane.b32.xlu0 %v1519, 24
        %v1534 = vpop.permute.xlu0 %1533
        %v1536 = vsel %vm1089, %v1375, %v1526
        %vm1537 = vcmask 130048
        %v1538 = vsel %vm1537, %v1536, %v1530
        %vm1539 = vcmask 195584
        %v1540 = vsel %vm1539, %v1538, %v1534
        %v1541 = vpack.c.bf16 %v1540, %v1540
        %v1542 = vld [vmem:[%s933] sm:$0xf]
        %v1543 = vld [vmem:[%s933 + $0x4] sm:$0xf]
        %v1544 = vld [vmem:[%s933 + $0x8] sm:$0xf]
        %v1545 = vld [vmem:[%s933 + $0xc] sm:$0xf]
        %v1546 = vld [vmem:[%s781] sm:$0x1]
        %v1548 = vlaneseq
        %v1549 = vshrl.u32 %v1548, 7
        %v1550 = vsub.s32 0, %v1549
        %v1551 = vrot.slane %v1546, %v1550
        %v1557 = vunpack.c.l.b16 %v1542
        %v1558 = vunpack.c.l.b16 %v1543
        %v1559 = vunpack.c.l.b16 %v1544
        %v1560 = vunpack.c.l.b16 %v1545
        %v1561 = vpack.c.b16 %v1558, %v1557
        %v1562 = vpack.c.b16 %v1560, %v1559
        %v1566 = vsel %vm1013, %v1541, 0
        %1568 = vmatprep.subr.bf16.mxu0 0
        %1569 = vmatpush1.bf16.msra.mxu0 %v1561
        %1570 = vmatprep.subr.bf16.mxu0 0
        %1571 = vmatpush1.bf16.msra.mxu0 %v1562
        %1572 = vmatprep.subr.bf16.mxu0 0
        %1573 = vmatpush1.bf16.msra.mxu0 0
        %1574 = vmatprep.subr.bf16.mxu0 0
        %1575 = vmatpush1.bf16.msra.mxu0 0
        %1576 = vmatprep.subr.bf16.mxu0 0
        %1577 = vmatpush1.bf16.msra.mxu0 0
        %1578 = vmatprep.subr.bf16.mxu0 0
        %1579 = vmatpush1.bf16.msra.mxu0 0
        %1580 = vmatprep.subr.bf16.mxu0 0
        %1581 = vmatpush1.bf16.msra.mxu0 0
        %1582 = vmatprep.subr.bf16.mxu0 0
        %1583 = vmatpush1.bf16.msra.mxu0 0
        %1584 = vmatprep.subr.bf16.mxu0 0
        %1585 = vmatpush1.bf16.msra.mxu0 0
        %1586 = vmatprep.subr.bf16.mxu0 0
        %1587 = vmatpush1.bf16.msra.mxu0 0
        %1588 = vmatprep.subr.bf16.mxu0 0
        %1589 = vmatpush1.bf16.msra.mxu0 0
        %1590 = vmatprep.subr.bf16.mxu0 0
        %1591 = vmatpush1.bf16.msra.mxu0 0
        %1592 = vmatprep.subr.bf16.mxu0 0
        %1593 = vmatpush1.bf16.msra.mxu0 0
        %1594 = vmatprep.subr.bf16.mxu0 0
        %1595 = vmatpush1.bf16.msra.mxu0 0
        %1596 = vmatprep.subr.bf16.mxu0 0
        %1597 = vmatpush1.bf16.msra.mxu0 0
        %1598 = vmatprep.subr.bf16.mxu0 0
        %1599 = vmatpush1.bf16.msra.mxu0 0
        %1600 = vmatprep.mubr.bf16.mxu0 0
        %1601 = vmatmul.mubr.bf16.gmra.mrb[0].mxu0 %v1566
        %v1602 = vpop.f32.mrb[0].mxu0
        %v1603 = vadd.f32 %v1551, %v1602
        %v1604 = vpop.f32.mrb[0].mxu0
        %v1605 = vpop.f32.mrb[0].mxu0
        %v1606 = vpop.f32.mrb[0].mxu0
        %1607 = vdwg.mxu0
        %v1608 = vadd.f32 %v988, %v1603
        %v1609 = vld [vmem:[%s789] sm:$0x1]
        %v1610 = vld [vmem:[%s797] sm:$0x1]
        %v1611 = vsel %vm1013, %v1608, 0.0
        %1612 = vadd.xlane.f32.xlu0 %v1611
        %v1613 = vpop.xlane.xlu0 %1612
        %v1614 = vrcp.pop 32.0
        %v1615 = vmul.f32 %v1613, %v1614
        %v1616 = vsub.f32 %v1608, %v1615
        %v1617 = vmul.f32 %v1616, %v1616
        %v1618 = vsel %vm1013, %v1617, 0.0
        %1619 = vadd.xlane.f32.xlu0 %v1618
        %v1620 = vpop.xlane.xlu0 %1619
        %v1621 = vmul.f32 %v1620, %v1614
        %v1622 = vadd.f32 %v1621, 1e-05
        %v1623 = vrsqrt.pop %v1622
        %v1624 = vmul.f32 %v1616, %v1623
        %v1626 = vlaneseq
        %v1627 = vshrl.u32 %v1626, 7
        %v1628 = vsub.s32 0, %v1627
        %v1629 = vrot.slane %v1609, %v1628
        %v1631 = vmul.f32 %v1624, %v1629
        %v1633 = vlaneseq
        %v1634 = vshrl.u32 %v1633, 7
        %v1635 = vsub.s32 0, %v1634
        %v1636 = vrot.slane %v1610, %v1635
        %v1638 = vadd.f32 %v1631, %v1636
        %v1639 = vpack.c.bf16 %v1638, %v1638
        %v1640 = vld [vmem:[%s938] sm:$0xf]
        %v1641 = vld [vmem:[%s938 + $0x4] sm:$0xf]
        %v1642 = vld [vmem:[%s938 + $0x8] sm:$0xf]
        %v1643 = vld [vmem:[%s938 + $0xc] sm:$0xf]
        %v1644 = vld [vmem:[%s805] sm:$0x1]
        %v1646 = vlaneseq
        %v1647 = vshrl.u32 %v1646, 7
        %v1648 = vsub.s32 0, %v1647
        %v1649 = vrot.slane %v1644, %v1648
        %v1655 = vunpack.c.l.b16 %v1640
        %v1656 = vunpack.c.l.b16 %v1641
        %v1657 = vunpack.c.l.b16 %v1642
        %v1658 = vunpack.c.l.b16 %v1643
        %v1659 = vpack.c.b16 %v1656, %v1655
        %v1660 = vpack.c.b16 %v1658, %v1657
        %v1664 = vsel %vm1013, %v1639, 0
        %1666 = vmatprep.subr.bf16.mxu0 0
        %1667 = vmatpush1.bf16.msra.mxu0 %v1659
        %1668 = vmatprep.subr.bf16.mxu0 0
        %1669 = vmatpush1.bf16.msra.mxu0 %v1660
        %1670 = vmatprep.subr.bf16.mxu0 0
        %1671 = vmatpush1.bf16.msra.mxu0 0
        %1672 = vmatprep.subr.bf16.mxu0 0
        %1673 = vmatpush1.bf16.msra.mxu0 0
        %1674 = vmatprep.subr.bf16.mxu0 0
        %1675 = vmatpush1.bf16.msra.mxu0 0
        %1676 = vmatprep.subr.bf16.mxu0 0
        %1677 = vmatpush1.bf16.msra.mxu0 0
        %1678 = vmatprep.subr.bf16.mxu0 0
        %1679 = vmatpush1.bf16.msra.mxu0 0
        %1680 = vmatprep.subr.bf16.mxu0 0
        %1681 = vmatpush1.bf16.msra.mxu0 0
        %1682 = vmatprep.subr.bf16.mxu0 0
        %1683 = vmatpush1.bf16.msra.mxu0 0
        %1684 = vmatprep.subr.bf16.mxu0 0
        %1685 = vmatpush1.bf16.msra.mxu0 0
        %1686 = vmatprep.subr.bf16.mxu0 0
        %1687 = vmatpush1.bf16.msra.mxu0 0
        %1688 = vmatprep.subr.bf16.mxu0 0
        %1689 = vmatpush1.bf16.msra.mxu0 0
        %1690 = vmatprep.subr.bf16.mxu0 0
        %1691 = vmatpush1.bf16.msra.mxu0 0
        %1692 = vmatprep.subr.bf16.mxu0 0
        %1693 = vmatpush1.bf16.msra.mxu0 0
        %1694 = vmatprep.subr.bf16.mxu0 0
        %1695 = vmatpush1.bf16.msra.mxu0 0
        %1696 = vmatprep.subr.bf16.mxu0 0
        %1697 = vmatpush1.bf16.msra.mxu0 0
        %1698 = vmatprep.mubr.bf16.mxu0 0
        %1699 = vmatmul.mubr.bf16.gmra.mrb[0].mxu0 %v1664
        %v1700 = vpop.f32.mrb[0].mxu0
        %v1701 = vadd.f32 %v1649, %v1700
        %v1702 = vpop.f32.mrb[0].mxu0
        %v1703 = vpop.f32.mrb[0].mxu0
        %v1704 = vpop.f32.mrb[0].mxu0
        %1705 = vdwg.mxu0
        %v1706 = vmul.f32 %v1701, 0.5
        %v1707 = vmul.f32 %v1701, 0.044715
        %v1708 = vmul.f32 %v1707, %v1701
        %v1709 = vmul.f32 %v1708, %v1701
        %v1710 = vadd.f32 %v1701, %v1709
        %v1711 = vmul.f32 %v1710, 0.7978846
        %v1712 = vtanh.pop %v1711
        %v1713 = vadd.f32 %v1712, 1.0
        %v1714 = vmul.f32 %v1706, %v1713
        %v1715 = vpack.c.bf16 %v1714, %v1714
        %v1716 = vld [vmem:[%s943] sm:$0xf]
        %v1717 = vld [vmem:[%s943 + $0x4] sm:$0xf]
        %v1718 = vld [vmem:[%s943 + $0x8] sm:$0xf]
        %v1719 = vld [vmem:[%s943 + $0xc] sm:$0xf]
        %v1720 = vld [vmem:[%s943 + $0x10] sm:$0xf]
        %v1721 = vld [vmem:[%s943 + $0x14] sm:$0xf]
        %v1722 = vld [vmem:[%s943 + $0x18] sm:$0xf]
        %v1723 = vld [vmem:[%s943 + $0x1c] sm:$0xf]
        %v1724 = vld [vmem:[%s813] sm:$0x1]
        %v1726 = vlaneseq
        %v1727 = vshrl.u32 %v1726, 7
        %v1728 = vsub.s32 0, %v1727
        %v1729 = vrot.slane %v1724, %v1728
        %v1739 = vunpack.c.l.b16 %v1716
        %v1740 = vunpack.c.l.b16 %v1717
        %v1741 = vunpack.c.l.b16 %v1718
        %v1742 = vunpack.c.l.b16 %v1719
        %v1743 = vunpack.c.l.b16 %v1720
        %v1744 = vunpack.c.l.b16 %v1721
        %v1745 = vunpack.c.l.b16 %v1722
        %v1746 = vunpack.c.l.b16 %v1723
        %v1747 = vpack.c.b16 %v1740, %v1739
        %v1748 = vpack.c.b16 %v1742, %v1741
        %v1749 = vpack.c.b16 %v1744, %v1743
        %v1750 = vpack.c.b16 %v1746, %v1745
        %vm1755 = vcmask 523264
        %v1757 = vsel %vm1755, %v1715, 0
        %1759 = vmatprep.subr.bf16.mxu0 0
        %1760 = vmatpush1.bf16.msra.mxu0 %v1747
        %1761 = vmatprep.subr.bf16.mxu0 0
        %1762 = vmatpush1.bf16.msra.mxu0 %v1748
        %1763 = vmatprep.subr.bf16.mxu0 0
        %1764 = vmatpush1.bf16.msra.mxu0 %v1749
        %1765 = vmatprep.subr.bf16.mxu0 0
        %1766 = vmatpush1.bf16.msra.mxu0 %v1750
        %1767 = vmatprep.subr.bf16.mxu0 0
        %1768 = vmatpush1.bf16.msra.mxu0 0
        %1769 = vmatprep.subr.bf16.mxu0 0
        %1770 = vmatpush1.bf16.msra.mxu0 0
        %1771 = vmatprep.subr.bf16.mxu0 0
        %1772 = vmatpush1.bf16.msra.mxu0 0
        %1773 = vmatprep.subr.bf16.mxu0 0
        %1774 = vmatpush1.bf16.msra.mxu0 0
        %1775 = vmatprep.subr.bf16.mxu0 0
        %1776 = vmatpush1.bf16.msra.mxu0 0
        %1777 = vmatprep.subr.bf16.mxu0 0
        %1778 = vmatpush1.bf16.msra.mxu0 0
        %1779 = vmatprep.subr.bf16.mxu0 0
        %1780 = vmatpush1.bf16.msra.mxu0 0
        %1781 = vmatprep.subr.bf16.mxu0 0
        %1782 = vmatpush1.bf16.msra.mxu0 0
        %1783 = vmatprep.subr.bf16.mxu0 0
        %1784 = vmatpush1.bf16.msra.mxu0 0
        %1785 = vmatprep.subr.bf16.mxu0 0
        %1786 = vmatpush1.bf16.msra.mxu0 0
        %1787 = vmatprep.subr.bf16.mxu0 0
        %1788 = vmatpush1.bf16.msra.mxu0 0
        %1789 = vmatprep.subr.bf16.mxu0 0
        %1790 = vmatpush1.bf16.msra.mxu0 0
        %1791 = vmatprep.mubr.bf16.mxu0 0
        %1792 = vmatmul.mubr.bf16.gmra.mrb[0].mxu0 %v1757
        %v1793 = vpop.f32.mrb[0].mxu0
        %v1794 = vadd.f32 %v1729, %v1793
        %v1795 = vpop.f32.mrb[0].mxu0
        %v1796 = vpop.f32.mrb[0].mxu0
        %v1797 = vpop.f32.mrb[0].mxu0
        %1798 = vdwg.mxu0
        %v1799 = vadd.f32 %v1638, %v1794
        %v1800 = vld [vmem:[%s946] sm:$0x1]
        %v1801 = vld [vmem:[%s949] sm:$0x1]
        %v1802 = vsel %vm1013, %v1799, 0.0
        %1803 = vadd.xlane.f32.xlu0 %v1802
        %v1804 = vpop.xlane.xlu0 %1803
        %v1805 = vmul.f32 %v1804, %v1614
        %v1806 = vsub.f32 %v1799, %v1805
        %v1807 = vmul.f32 %v1806, %v1806
        %v1808 = vsel %vm1013, %v1807, 0.0
        %1809 = vadd.xlane.f32.xlu0 %v1808
        %v1810 = vpop.xlane.xlu0 %1809
        %v1811 = vmul.f32 %v1810, %v1614
        %v1812 = vadd.f32 %v1811, 1e-05
        %v1813 = vrsqrt.pop %v1812
        %v1814 = vmul.f32 %v1806, %v1813
        %v1816 = vlaneseq
        %v1817 = vshrl.u32 %v1816, 7
        %v1818 = vsub.s32 0, %v1817
        %v1819 = vrot.slane %v1800, %v1818
        %v1821 = vmul.f32 %v1814, %v1819
        %v1823 = vlaneseq
        %v1824 = vshrl.u32 %v1823, 7
        %v1825 = vsub.s32 0, %v1824
        %v1826 = vrot.slane %v1801, %v1825
        %v1828 = vadd.f32 %v1821, %v1826
        %1829 = vst.msk [vmem:[#allocation2] sm:$0xff] %vm1013, %v1828
        %p1830 = scmp.eq.s32.totalorder %s42, 1
        // Predicated region
        $region133: #{tpu_custom_call.1} parent=95 // pred_check
          %p1831 = pneg %p1830
        $region134: #{tpu_custom_call.1} parent=95 // pred_check_branch
          %1833 = sbr.rel (%p1831) target = $region136
        $region135: #{tpu_custom_call.1} parent=95 // pred_region
          %v1834 = vpack.c.bf16 %v1828, %v1828
          %v1835 = vld [vmem:[%s16] sm:$0xf]
          %v1836 = vld [vmem:[%s16 + $0x4] sm:$0xf]
          %v1837 = vld [vmem:[%s16 + $0x8] sm:$0xf]
          %v1838 = vld [vmem:[%s16 + $0xc] sm:$0xf]
          %v1839 = vld [vmem:[%s17] sm:$0x1]
          %v1844 = vunpack.c.l.b16 %v1835
          %v1845 = vunpack.c.l.b16 %v1836
          %v1846 = vunpack.c.l.b16 %v1837
          %v1847 = vunpack.c.l.b16 %v1838
          %v1848 = vpack.c.b16 %v1845, %v1844
          %v1849 = vpack.c.b16 %v1847, %v1846
          %v1853 = vsel %vm1013, %v1834, 0
          %1855 = vmatprep.subr.bf16.mxu0 0
          %1856 = vmatpush1.bf16.msra.mxu0 %v1848
          %1857 = vmatprep.subr.bf16.mxu0 0
          %1858 = vmatpush1.bf16.msra.mxu0 %v1849
          %1859 = vmatprep.subr.bf16.mxu0 0
          %1860 = vmatpush1.bf16.msra.mxu0 0
          %1861 = vmatprep.subr.bf16.mxu0 0
          %1862 = vmatpush1.bf16.msra.mxu0 0
          %1863 = vmatprep.subr.bf16.mxu0 0
          %1864 = vmatpush1.bf16.msra.mxu0 0
          %1865 = vmatprep.subr.bf16.mxu0 0
          %1866 = vmatpush1.bf16.msra.mxu0 0
          %1867 = vmatprep.subr.bf16.mxu0 0
          %1868 = vmatpush1.bf16.msra.mxu0 0
          %1869 = vmatprep.subr.bf16.mxu0 0
          %1870 = vmatpush1.bf16.msra.mxu0 0
          %1871 = vmatprep.subr.bf16.mxu0 0
          %1872 = vmatpush1.bf16.msra.mxu0 0
          %1873 = vmatprep.subr.bf16.mxu0 0
          %1874 = vmatpush1.bf16.msra.mxu0 0
          %1875 = vmatprep.subr.bf16.mxu0 0
          %1876 = vmatpush1.bf16.msra.mxu0 0
          %1877 = vmatprep.subr.bf16.mxu0 0
          %1878 = vmatpush1.bf16.msra.mxu0 0
          %1879 = vmatprep.subr.bf16.mxu0 0
          %1880 = vmatpush1.bf16.msra.mxu0 0
          %1881 = vmatprep.subr.bf16.mxu0 0
          %1882 = vmatpush1.bf16.msra.mxu0 0
          %1883 = vmatprep.subr.bf16.mxu0 0
          %1884 = vmatpush1.bf16.msra.mxu0 0
          %1885 = vmatprep.subr.bf16.mxu0 0
          %1886 = vmatpush1.bf16.msra.mxu0 0
          %1887 = vmatprep.mubr.bf16.mxu0 0
          %1888 = vmatmul.mubr.bf16.gmra.mrb[0].mxu0 %v1853
          %v1889 = vpop.f32.mrb[0].mxu0
          %v1890 = vadd.f32 %v1839, %v1889
          %v1891 = vpop.f32.mrb[0].mxu0
          %v1892 = vpop.f32.mrb[0].mxu0
          %v1893 = vpop.f32.mrb[0].mxu0
          %1894 = vdwg.mxu0
          %v1895 = vpack.c.bf16 %v1890, %v1890
          %v1896 = vld [vmem:[%s18] sm:$0xf]
          %v1897 = vld [vmem:[%s18 + $0x4] sm:$0xf]
          %v1898 = vld [vmem:[%s18 + $0x8] sm:$0xf]
          %v1899 = vld [vmem:[%s18 + $0xc] sm:$0xf]
          %v1904 = vunpack.c.l.b16 %v1896
          %v1905 = vunpack.c.l.b16 %v1897
          %v1906 = vunpack.c.l.b16 %v1898
          %v1907 = vunpack.c.l.b16 %v1899
          %v1908 = vpack.c.b16 %v1905, %v1904
          %v1909 = vpack.c.b16 %v1907, %v1906
          %v1913 = vsel %vm1013, %v1895, 0
          %1915 = vmatprep.subr.bf16.mxu0 0
          %1916 = vmatpush1.bf16.msra.mxu0 %v1908
          %1917 = vmatprep.subr.bf16.mxu0 0
          %1918 = vmatpush1.bf16.msra.mxu0 %v1909
          %1919 = vmatprep.subr.bf16.mxu0 0
          %1920 = vmatpush1.bf16.msra.mxu0 0
          %1921 = vmatprep.subr.bf16.mxu0 0
          %1922 = vmatpush1.bf16.msra.mxu0 0
          %1923 = vmatprep.subr.bf16.mxu0 0
          %1924 = vmatpush1.bf16.msra.mxu0 0
          %1925 = vmatprep.subr.bf16.mxu0 0
          %1926 = vmatpush1.bf16.msra.mxu0 0
          %1927 = vmatprep.subr.bf16.mxu0 0
          %1928 = vmatpush1.bf16.msra.mxu0 0
          %1929 = vmatprep.subr.bf16.mxu0 0
          %1930 = vmatpush1.bf16.msra.mxu0 0
          %1931 = vmatprep.subr.bf16.mxu0 0
          %1932 = vmatpush1.bf16.msra.mxu0 0
          %1933 = vmatprep.subr.bf16.mxu0 0
          %1934 = vmatpush1.bf16.msra.mxu0 0
          %1935 = vmatprep.subr.bf16.mxu0 0
          %1936 = vmatpush1.bf16.msra.mxu0 0
          %1937 = vmatprep.subr.bf16.mxu0 0
          %1938 = vmatpush1.bf16.msra.mxu0 0
          %1939 = vmatprep.subr.bf16.mxu0 0
          %1940 = vmatpush1.bf16.msra.mxu0 0
          %1941 = vmatprep.subr.bf16.mxu0 0
          %1942 = vmatpush1.bf16.msra.mxu0 0
          %1943 = vmatprep.subr.bf16.mxu0 0
          %1944 = vmatpush1.bf16.msra.mxu0 0
          %1945 = vmatprep.subr.bf16.mxu0 0
          %1946 = vmatpush1.bf16.msra.mxu0 0
          %1947 = vmatprep.mubr.bf16.mxu0 0
          %1948 = vmatmul.mubr.bf16.gmra.mrb[0].mxu0 %v1913
          %v1949 = vpop.f32.mrb[0].mxu0
          %v1950 = vadd.f32 0.0, %v1949
          %v1951 = vpop.f32.mrb[0].mxu0
          %v1952 = vpop.f32.mrb[0].mxu0
          %v1953 = vpop.f32.mrb[0].mxu0
          %1954 = vdwg.mxu0
          %vm1955 = vcmask 122880
          %1956 = vst.msk [vmem:[%s919] sm:$0x1] %vm1955, %v1950
        $region136: #{tpu_custom_call.1} parent=95 // pred_fallthru
          _
        %s1957 = sand.u32 %s526, 1
        %s1958 = scalar_lea.sflag [#allocation5], %s1957
        %s1959 = sand.u32 %s526, 1
        %s1960 = scalar_lea.vmem [#allocation14], %s1959
        // Predicated region
        $region137: #{tpu_custom_call.1} parent=95 // pred_check
          %p1961 = pneg %p536
        $region138: #{tpu_custom_call.1} parent=95 // pred_check_branch
          %1963 = sbr.rel (%p1961) target = $region140
        $region139: #{tpu_custom_call.1} parent=95 // pred_region
          %s1965 = ssub.s32 16, 16
          %1966 = vsyncadd %s1958, %s1965
          %s1967 = smul.addr %s41, 16
          %s1968 = scalar_lea.hbm %s19, %s1967
          %s1970 = sshll.u32 %s1960, 4
          %s1971 = int_to_ptr.vmem [resolvable:$true] %s1970
          %1973 = dma.vmem_to_hbm [thread:$0]  %s1971, 16, %s1968, %s1958
        $region140: #{tpu_custom_call.1} parent=95 // pred_fallthru
          _
      $region96: #{tpu_custom_call.1} parent=5 // pred_fallthru
        _
      %p1974 = scmp.le.s32.totalorder 2, %s32
      // Predicated region
      $region141: #{tpu_custom_call.1} parent=5 // pred_check
        %p1975 = pneg %p1974
      $region142: #{tpu_custom_call.1} parent=5 // pred_check_branch
        %1977 = sbr.rel (%p1975) target = $region144
      $region143: #{tpu_custom_call.1} parent=5 // pred_region
        %s1978 = ssub.s32 %s32, 2
        // Predicated region
        $region145: #{tpu_custom_call.1} parent=143 // pred_check
          %p1979 = pneg %p542
        $region146: #{tpu_custom_call.1} parent=143 // pred_check_branch
          %1981 = sbr.rel (%p1979) target = $region148
        $region147: #{tpu_custom_call.1} parent=143 // pred_region
          %s1982 = sand.u32 %s527, 1
          %s1983 = scalar_lea.sflag [#allocation5], %s1982
          %s1984 = sand.u32 %s527, 1
          %s1985 = scalar_lea.vmem [#allocation14], %s1984
          %1986 = dma.done %s1983, 16
        $region148: #{tpu_custom_call.1} parent=143 // pred_fallthru
          _
      $region144: #{tpu_custom_call.1} parent=5 // pred_fallthru
        _
    $region6: #{tpu_custom_call.1} parent=1 // loop_footer
      %s36 = sadd.s32 1, %s32
    $region7: #{tpu_custom_call.1} parent=1 // loop_footer_branch
      %31 = sbr.rel target = $region3
    $region8: #{tpu_custom_call.1} parent=1 // loop_exit
      _
    %1987 = vsyncpa [#allocation4], 1
    %s1988 = scalar_lea.sflag [#allocation4], 1
    %1989 = vsyncpa %s1988, 1
    %1990 = vsyncpa [#allocation7], 1
    %1991 = vsyncpa [#allocation5], 1
    %s1992 = scalar_lea.sflag [#allocation5], 1
    %1993 = vsyncpa %s1992, 1

</llo_original>
